<compile_context>
chip_gen: v7x
topology: tpu7x:2x2x1
jax: 0.10.0
libtpu: 0.0.40
codegen_flags: <defaults>
</compile_context>

<pallas_src>
import math
from functools import partial

import jax
import jax.numpy as jnp
import numpy as np
from jax.experimental import pallas as pl
from jax.experimental.pallas import tpu as pltpu

BN_EPS = 1e-5


# ----------------------------------------------------------------------------
# Fused Postnet kernel: all conv blocks for one batch item, activations stay in VMEM.
# ----------------------------------------------------------------------------
def _postnet_kernel(n_convs, kernel_size, x_ref, *args):
    # args = (w_0, scale_0, shift_0, ..., w_{L-1}, scale_{L-1}, shift_{L-1}, out_ref)
    out_ref = args[3 * n_convs]
    pad = (kernel_size - 1) // 2

    h = x_ref[0]                                # (T, C_in0) float32
    T = h.shape[0]

    for li in range(n_convs):                   # unrolled at trace time (static layer count)
        w = args[3 * li][...]                   # (K*Cin, Cout) bf16 (pre-reshaped/transposed)
        scale = args[3 * li + 1][...]           # (1, Cout) f32   gamma/sqrt(var+eps)
        shift = args[3 * li + 2][...]           # (1, Cout) f32   folded conv-bias + BN shift

        c_in = h.shape[1]
        zrow = jnp.zeros((pad, c_in), h.dtype)
        hp = jnp.concatenate([zrow, h, zrow], axis=0)              # (T + 2*pad, Cin)
        # im2col: cols[t, k*Cin + c] = hp[t + k, c]
        cols = jnp.concatenate([hp[k:k + T, :] for k in range(kernel_size)], axis=-1)

        # conv as a single MXU matmul, bf16 inputs, f32 accumulation
        y = jnp.dot(cols.astype(jnp.bfloat16), w,
                    preferred_element_type=jnp.float32)            # (T, Cout) f32
        y = y * scale + shift                                      # conv bias + BN (eval) folded
        if li < n_convs - 1:
            y = jnp.tanh(y)                                        # EUP; last block has no activation
        h = y

    out_ref[0] = h


def _zeros_index_map(nd):
    return lambda b: (0,) * nd


def postnet_pallas(x_bct, kparams, kernel_size=5):
    """x_bct: (B, C_mel, T) float32.  Returns (B, C_mel, T) float32."""
    B, C_mel, T = x_bct.shape
    n_convs = len(kparams)

    # channels-last so channel contraction feeds the MXU directly
    x = x_bct.transpose(0, 2, 1)                                   # (B, T, C_mel)

    flat = []
    for lp in kparams:
        flat += [lp['w'], lp['scale'], lp['shift']]

    in_specs = [pl.BlockSpec((1, T, C_mel), lambda b: (b, 0, 0))]
    in_specs += [pl.BlockSpec(a.shape, _zeros_index_map(a.ndim)) for a in flat]
    out_spec = pl.BlockSpec((1, T, C_mel), lambda b: (b, 0, 0))

    out = pl.pallas_call(
        partial(_postnet_kernel, n_convs, kernel_size),
        out_shape=jax.ShapeDtypeStruct((B, T, C_mel), jnp.float32),
        grid=(B,),
        in_specs=in_specs,
        out_specs=out_spec,
        compiler_params=pltpu.CompilerParams(dimension_semantics=("parallel",)),
    )(x, *flat)

    return out.transpose(0, 2, 1)                                  # back to (B, C_mel, T)


# ----------------------------------------------------------------------------
# One-time parameter preparation (hoisted out of the per-call wrapper)
# ----------------------------------------------------------------------------
def prepare_postnet_params(raw_layers, eps=BN_EPS):
    prepared = []
    for lp in raw_layers:
        w = lp['weight']                                   # (Cout, Cin, K) PyTorch layout
        cout, cin, K = w.shape
        # Wbig[k*Cin + c, o] = w[o, c, k]  -> im2col matmul weight
        wbig = jnp.transpose(w, (2, 1, 0)).reshape(K * cin, cout)
        scale = lp['gamma'] / jnp.sqrt(lp['running_var'] + eps)
        shift = (lp['bias'] - lp['running_mean']) * scale + lp['beta']
        prepared.append(dict(
            w=wbig.astype(jnp.bfloat16),
            scale=scale.reshape(1, cout).astype(jnp.float32),
            shift=shift.reshape(1, cout).astype(jnp.float32),
        ))
    return prepared


# ----------------------------------------------------------------------------
# Pure-JAX reference (f32, HIGHEST) for correctness checking
# ----------------------------------------------------------------------------
def postnet_reference(x, raw_layers, kernel_size=5, eps=BN_EPS):
    pad = (kernel_size - 1) // 2
    h = x
    n = len(raw_layers)
    for li, lp in enumerate(raw_layers):
        y = jax.lax.conv_general_dilated(
            h, lp['weight'], window_strides=(1,), padding=[(pad, pad)],
            dimension_numbers=('NCH', 'OIH', 'NCH'),
            precision=jax.lax.Precision.HIGHEST)
        y = y + lp['bias'][None, :, None]
        y = ((y - lp['running_mean'][None, :, None])
             / jnp.sqrt(lp['running_var'] + eps)[None, :, None]
             * lp['gamma'][None, :, None] + lp['beta'][None, :, None])
        if li < n - 1:
            y = jnp.tanh(y)
        h = y
    return h


# ----------------------------------------------------------------------------
# Deterministic parameter construction (PyTorch-style conv init, non-trivial BN stats)
# ----------------------------------------------------------------------------
def make_params(key, n_mel, postnet_dim, n_convs=5, kernel_size=5):
    dims = [n_mel] + [postnet_dim] * (n_convs - 1) + [n_mel]
    keys = jax.random.split(key, n_convs)
    layers = []
    for li in range(n_convs):
        cin, cout = dims[li], dims[li + 1]
        k = jax.random.split(keys[li], 6)
        bound = 1.0 / math.sqrt(cin * kernel_size)
        layers.append(dict(
            weight=jax.random.uniform(k[0], (cout, cin, kernel_size), jnp.float32, -bound, bound),
            bias=jax.random.uniform(k[1], (cout,), jnp.float32, -bound, bound),
            gamma=1.0 + 0.1 * jax.random.normal(k[2], (cout,), jnp.float32),
            beta=0.1 * jax.random.normal(k[3], (cout,), jnp.float32),
            running_mean=0.1 * jax.random.normal(k[4], (cout,), jnp.float32),
            running_var=jax.random.uniform(k[5], (cout,), jnp.float32, 0.5, 1.5),
        ))
    return layers


# ----------------------------------------------------------------------------
if __name__ == "__main__":
    # small shapes consistent with the module: (B, n_mel_channels, T)
    B, n_mel, T = 2, 8, 16
    postnet_dim, n_convs, kernel_size = 32, 5, 5

    key = jax.random.PRNGKey(0)
    k_par, k_in = jax.random.split(key)

    raw_params = make_params(k_par, n_mel, postnet_dim, n_convs, kernel_size)
    kparams = prepare_postnet_params(raw_params)

    x = jax.random.normal(k_in, (B, n_mel, T), jnp.float32)

    out = postnet_pallas(x, kparams, kernel_size)
    out = jax.block_until_ready(out)

    ref = postnet_reference(x, raw_params, kernel_size)
    np.testing.assert_allclose(np.asarray(out), np.asarray(ref), rtol=2e-2, atol=2e-2)
    assert out.shape == (B, n_mel, T)

    print("KERNEL_OK")
</pallas_src>

<mosaic_0001>
module attributes {stable_mosaic.version = 11 : i64} {
  func.func @_postnet_kernel(%arg0: i32, %arg1: memref<1x16x8xf32, #tpu.memory_space<vmem>>, %arg2: memref<40x32xbf16, #tpu.memory_space<vmem>>, %arg3: memref<1x32xf32, #tpu.memory_space<vmem>>, %arg4: memref<1x32xf32, #tpu.memory_space<vmem>>, %arg5: memref<160x32xbf16, #tpu.memory_space<vmem>>, %arg6: memref<1x32xf32, #tpu.memory_space<vmem>>, %arg7: memref<1x32xf32, #tpu.memory_space<vmem>>, %arg8: memref<160x32xbf16, #tpu.memory_space<vmem>>, %arg9: memref<1x32xf32, #tpu.memory_space<vmem>>, %arg10: memref<1x32xf32, #tpu.memory_space<vmem>>, %arg11: memref<160x32xbf16, #tpu.memory_space<vmem>>, %arg12: memref<1x32xf32, #tpu.memory_space<vmem>>, %arg13: memref<1x32xf32, #tpu.memory_space<vmem>>, %arg14: memref<160x8xbf16, #tpu.memory_space<vmem>>, %arg15: memref<1x8xf32, #tpu.memory_space<vmem>>, %arg16: memref<1x8xf32, #tpu.memory_space<vmem>>, %arg17: memref<1x16x8xf32, #tpu.memory_space<vmem>>) attributes {dimension_semantics = [#tpu.dimension_semantics<parallel>], iteration_bounds = array<i64: 2>, scalar_prefetch = 0 : i64, scratch_operands = 0 : i64, tpu.core_type = #tpu.core_type<tc>, window_params = [{transform_indices = @transform_0, window_bounds = array<i64: 1, 16, 8>}, {pipeline_mode = #tpu.pipeline_mode<synchronous>, transform_indices = @transform_1, window_bounds = array<i64: 40, 32>}, {pipeline_mode = #tpu.pipeline_mode<synchronous>, transform_indices = @transform_2, window_bounds = array<i64: 1, 32>}, {pipeline_mode = #tpu.pipeline_mode<synchronous>, transform_indices = @transform_3, window_bounds = array<i64: 1, 32>}, {pipeline_mode = #tpu.pipeline_mode<synchronous>, transform_indices = @transform_4, window_bounds = array<i64: 160, 32>}, {pipeline_mode = #tpu.pipeline_mode<synchronous>, transform_indices = @transform_5, window_bounds = array<i64: 1, 32>}, {pipeline_mode = #tpu.pipeline_mode<synchronous>, transform_indices = @transform_6, window_bounds = array<i64: 1, 32>}, {pipeline_mode = #tpu.pipeline_mode<synchronous>, transform_indices = @transform_7, window_bounds = array<i64: 160, 32>}, {pipeline_mode = #tpu.pipeline_mode<synchronous>, transform_indices = @transform_8, window_bounds = array<i64: 1, 32>}, {pipeline_mode = #tpu.pipeline_mode<synchronous>, transform_indices = @transform_9, window_bounds = array<i64: 1, 32>}, {pipeline_mode = #tpu.pipeline_mode<synchronous>, transform_indices = @transform_10, window_bounds = array<i64: 160, 32>}, {pipeline_mode = #tpu.pipeline_mode<synchronous>, transform_indices = @transform_11, window_bounds = array<i64: 1, 32>}, {pipeline_mode = #tpu.pipeline_mode<synchronous>, transform_indices = @transform_12, window_bounds = array<i64: 1, 32>}, {pipeline_mode = #tpu.pipeline_mode<synchronous>, transform_indices = @transform_13, window_bounds = array<i64: 160, 8>}, {pipeline_mode = #tpu.pipeline_mode<synchronous>, transform_indices = @transform_14, window_bounds = array<i64: 1, 8>}, {pipeline_mode = #tpu.pipeline_mode<synchronous>, transform_indices = @transform_15, window_bounds = array<i64: 1, 8>}, {transform_indices = @transform_16, window_bounds = array<i64: 1, 16, 8>}]} {
    %c0 = arith.constant 0 : index
    %c0_0 = arith.constant 0 : index
    %c0_1 = arith.constant 0 : index
    %0 = vector.load %arg1[%c0, %c0_0, %c0_1] : memref<1x16x8xf32, #tpu.memory_space<vmem>>, vector<1x16x8xf32>
    %1 = vector.shape_cast %0 : vector<1x16x8xf32> to vector<16x8xf32>
    %c0_2 = arith.constant 0 : index
    %c0_3 = arith.constant 0 : index
    %2 = vector.load %arg2[%c0_2, %c0_3] : memref<40x32xbf16, #tpu.memory_space<vmem>>, vector<40x32xbf16>
    %c0_4 = arith.constant 0 : index
    %c0_5 = arith.constant 0 : index
    %3 = vector.load %arg3[%c0_4, %c0_5] : memref<1x32xf32, #tpu.memory_space<vmem>>, vector<1x32xf32>
    %c0_6 = arith.constant 0 : index
    %c0_7 = arith.constant 0 : index
    %4 = vector.load %arg4[%c0_6, %c0_7] : memref<1x32xf32, #tpu.memory_space<vmem>>, vector<1x32xf32>
    %cst = arith.constant 0.000000e+00 : f32
    %5 = vector.broadcast %cst : f32 to vector<2x8xf32>
    %6 = tpu.concatenate %5, %1, %5 in 0 : vector<2x8xf32>, vector<16x8xf32>, vector<2x8xf32> -> vector<20x8xf32>
    %7 = vector.extract_strided_slice %6 {offsets = [0, 0], sizes = [16, 8], strides = [1, 1]} : vector<20x8xf32> to vector<16x8xf32>
    %8 = vector.extract_strided_slice %6 {offsets = [1, 0], sizes = [16, 8], strides = [1, 1]} : vector<20x8xf32> to vector<16x8xf32>
    %9 = vector.extract_strided_slice %6 {offsets = [2, 0], sizes = [16, 8], strides = [1, 1]} : vector<20x8xf32> to vector<16x8xf32>
    %10 = vector.extract_strided_slice %6 {offsets = [3, 0], sizes = [16, 8], strides = [1, 1]} : vector<20x8xf32> to vector<16x8xf32>
    %11 = vector.extract_strided_slice %6 {offsets = [4, 0], sizes = [16, 8], strides = [1, 1]} : vector<20x8xf32> to vector<16x8xf32>
    %12 = tpu.concatenate %7, %8, %9, %10, %11 in 1 : vector<16x8xf32>, vector<16x8xf32>, vector<16x8xf32>, vector<16x8xf32>, vector<16x8xf32> -> vector<16x40xf32>
    %13 = arith.truncf %12 : vector<16x40xf32> to vector<16x40xbf16>
    %cst_8 = arith.constant dense<0.000000e+00> : vector<16x32xf32>
    %14 = tpu.matmul %13, %2, %cst_8 {dimension_numbers = #tpu.dot_dimension_numbers<[1], [0], [0], [1], [0, 0, 1, 1], [], []>} : vector<16x40xbf16>, vector<40x32xbf16>, vector<16x32xf32> -> vector<16x32xf32>
    %15 = vector.broadcast %3 : vector<1x32xf32> to vector<16x32xf32>
    %16 = arith.mulf %14, %15 : vector<16x32xf32>
    %17 = vector.broadcast %4 : vector<1x32xf32> to vector<16x32xf32>
    %18 = arith.addf %16, %17 : vector<16x32xf32>
    %19 = math.tanh %18 : vector<16x32xf32>
    %c0_9 = arith.constant 0 : index
    %c0_10 = arith.constant 0 : index
    %20 = vector.load %arg5[%c0_9, %c0_10] : memref<160x32xbf16, #tpu.memory_space<vmem>>, vector<160x32xbf16>
    %c0_11 = arith.constant 0 : index
    %c0_12 = arith.constant 0 : index
    %21 = vector.load %arg6[%c0_11, %c0_12] : memref<1x32xf32, #tpu.memory_space<vmem>>, vector<1x32xf32>
    %c0_13 = arith.constant 0 : index
    %c0_14 = arith.constant 0 : index
    %22 = vector.load %arg7[%c0_13, %c0_14] : memref<1x32xf32, #tpu.memory_space<vmem>>, vector<1x32xf32>
    %cst_15 = arith.constant 0.000000e+00 : f32
    %23 = vector.broadcast %cst_15 : f32 to vector<2x32xf32>
    %24 = tpu.concatenate %23, %19, %23 in 0 : vector<2x32xf32>, vector<16x32xf32>, vector<2x32xf32> -> vector<20x32xf32>
    %25 = vector.extract_strided_slice %24 {offsets = [0, 0], sizes = [16, 32], strides = [1, 1]} : vector<20x32xf32> to vector<16x32xf32>
    %26 = vector.extract_strided_slice %24 {offsets = [1, 0], sizes = [16, 32], strides = [1, 1]} : vector<20x32xf32> to vector<16x32xf32>
    %27 = vector.extract_strided_slice %24 {offsets = [2, 0], sizes = [16, 32], strides = [1, 1]} : vector<20x32xf32> to vector<16x32xf32>
    %28 = vector.extract_strided_slice %24 {offsets = [3, 0], sizes = [16, 32], strides = [1, 1]} : vector<20x32xf32> to vector<16x32xf32>
    %29 = vector.extract_strided_slice %24 {offsets = [4, 0], sizes = [16, 32], strides = [1, 1]} : vector<20x32xf32> to vector<16x32xf32>
    %30 = tpu.concatenate %25, %26, %27, %28, %29 in 1 : vector<16x32xf32>, vector<16x32xf32>, vector<16x32xf32>, vector<16x32xf32>, vector<16x32xf32> -> vector<16x160xf32>
    %31 = arith.truncf %30 : vector<16x160xf32> to vector<16x160xbf16>
    %cst_16 = arith.constant dense<0.000000e+00> : vector<16x32xf32>
    %32 = tpu.matmul %31, %20, %cst_16 {dimension_numbers = #tpu.dot_dimension_numbers<[1], [0], [0], [1], [0, 0, 1, 1], [], []>} : vector<16x160xbf16>, vector<160x32xbf16>, vector<16x32xf32> -> vector<16x32xf32>
    %33 = vector.broadcast %21 : vector<1x32xf32> to vector<16x32xf32>
    %34 = arith.mulf %32, %33 : vector<16x32xf32>
    %35 = vector.broadcast %22 : vector<1x32xf32> to vector<16x32xf32>
    %36 = arith.addf %34, %35 : vector<16x32xf32>
    %37 = math.tanh %36 : vector<16x32xf32>
    %c0_17 = arith.constant 0 : index
    %c0_18 = arith.constant 0 : index
    %38 = vector.load %arg8[%c0_17, %c0_18] : memref<160x32xbf16, #tpu.memory_space<vmem>>, vector<160x32xbf16>
    %c0_19 = arith.constant 0 : index
    %c0_20 = arith.constant 0 : index
    %39 = vector.load %arg9[%c0_19, %c0_20] : memref<1x32xf32, #tpu.memory_space<vmem>>, vector<1x32xf32>
    %c0_21 = arith.constant 0 : index
    %c0_22 = arith.constant 0 : index
    %40 = vector.load %arg10[%c0_21, %c0_22] : memref<1x32xf32, #tpu.memory_space<vmem>>, vector<1x32xf32>
    %cst_23 = arith.constant 0.000000e+00 : f32
    %41 = vector.broadcast %cst_23 : f32 to vector<2x32xf32>
    %42 = tpu.concatenate %41, %37, %41 in 0 : vector<2x32xf32>, vector<16x32xf32>, vector<2x32xf32> -> vector<20x32xf32>
    %43 = vector.extract_strided_slice %42 {offsets = [0, 0], sizes = [16, 32], strides = [1, 1]} : vector<20x32xf32> to vector<16x32xf32>
    %44 = vector.extract_strided_slice %42 {offsets = [1, 0], sizes = [16, 32], strides = [1, 1]} : vector<20x32xf32> to vector<16x32xf32>
    %45 = vector.extract_strided_slice %42 {offsets = [2, 0], sizes = [16, 32], strides = [1, 1]} : vector<20x32xf32> to vector<16x32xf32>
    %46 = vector.extract_strided_slice %42 {offsets = [3, 0], sizes = [16, 32], strides = [1, 1]} : vector<20x32xf32> to vector<16x32xf32>
    %47 = vector.extract_strided_slice %42 {offsets = [4, 0], sizes = [16, 32], strides = [1, 1]} : vector<20x32xf32> to vector<16x32xf32>
    %48 = tpu.concatenate %43, %44, %45, %46, %47 in 1 : vector<16x32xf32>, vector<16x32xf32>, vector<16x32xf32>, vector<16x32xf32>, vector<16x32xf32> -> vector<16x160xf32>
    %49 = arith.truncf %48 : vector<16x160xf32> to vector<16x160xbf16>
    %cst_24 = arith.constant dense<0.000000e+00> : vector<16x32xf32>
    %50 = tpu.matmul %49, %38, %cst_24 {dimension_numbers = #tpu.dot_dimension_numbers<[1], [0], [0], [1], [0, 0, 1, 1], [], []>} : vector<16x160xbf16>, vector<160x32xbf16>, vector<16x32xf32> -> vector<16x32xf32>
    %51 = vector.broadcast %39 : vector<1x32xf32> to vector<16x32xf32>
    %52 = arith.mulf %50, %51 : vector<16x32xf32>
    %53 = vector.broadcast %40 : vector<1x32xf32> to vector<16x32xf32>
    %54 = arith.addf %52, %53 : vector<16x32xf32>
    %55 = math.tanh %54 : vector<16x32xf32>
    %c0_25 = arith.constant 0 : index
    %c0_26 = arith.constant 0 : index
    %56 = vector.load %arg11[%c0_25, %c0_26] : memref<160x32xbf16, #tpu.memory_space<vmem>>, vector<160x32xbf16>
    %c0_27 = arith.constant 0 : index
    %c0_28 = arith.constant 0 : index
    %57 = vector.load %arg12[%c0_27, %c0_28] : memref<1x32xf32, #tpu.memory_space<vmem>>, vector<1x32xf32>
    %c0_29 = arith.constant 0 : index
    %c0_30 = arith.constant 0 : index
    %58 = vector.load %arg13[%c0_29, %c0_30] : memref<1x32xf32, #tpu.memory_space<vmem>>, vector<1x32xf32>
    %cst_31 = arith.constant 0.000000e+00 : f32
    %59 = vector.broadcast %cst_31 : f32 to vector<2x32xf32>
    %60 = tpu.concatenate %59, %55, %59 in 0 : vector<2x32xf32>, vector<16x32xf32>, vector<2x32xf32> -> vector<20x32xf32>
    %61 = vector.extract_strided_slice %60 {offsets = [0, 0], sizes = [16, 32], strides = [1, 1]} : vector<20x32xf32> to vector<16x32xf32>
    %62 = vector.extract_strided_slice %60 {offsets = [1, 0], sizes = [16, 32], strides = [1, 1]} : vector<20x32xf32> to vector<16x32xf32>
    %63 = vector.extract_strided_slice %60 {offsets = [2, 0], sizes = [16, 32], strides = [1, 1]} : vector<20x32xf32> to vector<16x32xf32>
    %64 = vector.extract_strided_slice %60 {offsets = [3, 0], sizes = [16, 32], strides = [1, 1]} : vector<20x32xf32> to vector<16x32xf32>
    %65 = vector.extract_strided_slice %60 {offsets = [4, 0], sizes = [16, 32], strides = [1, 1]} : vector<20x32xf32> to vector<16x32xf32>
    %66 = tpu.concatenate %61, %62, %63, %64, %65 in 1 : vector<16x32xf32>, vector<16x32xf32>, vector<16x32xf32>, vector<16x32xf32>, vector<16x32xf32> -> vector<16x160xf32>
    %67 = arith.truncf %66 : vector<16x160xf32> to vector<16x160xbf16>
    %cst_32 = arith.constant dense<0.000000e+00> : vector<16x32xf32>
    %68 = tpu.matmul %67, %56, %cst_32 {dimension_numbers = #tpu.dot_dimension_numbers<[1], [0], [0], [1], [0, 0, 1, 1], [], []>} : vector<16x160xbf16>, vector<160x32xbf16>, vector<16x32xf32> -> vector<16x32xf32>
    %69 = vector.broadcast %57 : vector<1x32xf32> to vector<16x32xf32>
    %70 = arith.mulf %68, %69 : vector<16x32xf32>
    %71 = vector.broadcast %58 : vector<1x32xf32> to vector<16x32xf32>
    %72 = arith.addf %70, %71 : vector<16x32xf32>
    %73 = math.tanh %72 : vector<16x32xf32>
    %c0_33 = arith.constant 0 : index
    %c0_34 = arith.constant 0 : index
    %74 = vector.load %arg14[%c0_33, %c0_34] : memref<160x8xbf16, #tpu.memory_space<vmem>>, vector<160x8xbf16>
    %c0_35 = arith.constant 0 : index
    %c0_36 = arith.constant 0 : index
    %75 = vector.load %arg15[%c0_35, %c0_36] : memref<1x8xf32, #tpu.memory_space<vmem>>, vector<1x8xf32>
    %c0_37 = arith.constant 0 : index
    %c0_38 = arith.constant 0 : index
    %76 = vector.load %arg16[%c0_37, %c0_38] : memref<1x8xf32, #tpu.memory_space<vmem>>, vector<1x8xf32>
    %cst_39 = arith.constant 0.000000e+00 : f32
    %77 = vector.broadcast %cst_39 : f32 to vector<2x32xf32>
    %78 = tpu.concatenate %77, %73, %77 in 0 : vector<2x32xf32>, vector<16x32xf32>, vector<2x32xf32> -> vector<20x32xf32>
    %79 = vector.extract_strided_slice %78 {offsets = [0, 0], sizes = [16, 32], strides = [1, 1]} : vector<20x32xf32> to vector<16x32xf32>
    %80 = vector.extract_strided_slice %78 {offsets = [1, 0], sizes = [16, 32], strides = [1, 1]} : vector<20x32xf32> to vector<16x32xf32>
    %81 = vector.extract_strided_slice %78 {offsets = [2, 0], sizes = [16, 32], strides = [1, 1]} : vector<20x32xf32> to vector<16x32xf32>
    %82 = vector.extract_strided_slice %78 {offsets = [3, 0], sizes = [16, 32], strides = [1, 1]} : vector<20x32xf32> to vector<16x32xf32>
    %83 = vector.extract_strided_slice %78 {offsets = [4, 0], sizes = [16, 32], strides = [1, 1]} : vector<20x32xf32> to vector<16x32xf32>
    %84 = tpu.concatenate %79, %80, %81, %82, %83 in 1 : vector<16x32xf32>, vector<16x32xf32>, vector<16x32xf32>, vector<16x32xf32>, vector<16x32xf32> -> vector<16x160xf32>
    %85 = arith.truncf %84 : vector<16x160xf32> to vector<16x160xbf16>
    %cst_40 = arith.constant dense<0.000000e+00> : vector<16x8xf32>
    %86 = tpu.matmul %85, %74, %cst_40 {dimension_numbers = #tpu.dot_dimension_numbers<[1], [0], [0], [1], [0, 0, 1, 1], [], []>} : vector<16x160xbf16>, vector<160x8xbf16>, vector<16x8xf32> -> vector<16x8xf32>
    %87 = vector.broadcast %75 : vector<1x8xf32> to vector<16x8xf32>
    %88 = arith.mulf %86, %87 : vector<16x8xf32>
    %89 = vector.broadcast %76 : vector<1x8xf32> to vector<16x8xf32>
    %90 = arith.addf %88, %89 : vector<16x8xf32>
    %c0_41 = arith.constant 0 : index
    %c0_42 = arith.constant 0 : index
    %c0_43 = arith.constant 0 : index
    %91 = vector.load %arg17[%c0_41, %c0_42, %c0_43] : memref<1x16x8xf32, #tpu.memory_space<vmem>>, vector<1x16x8xf32>
    %92 = vector.shape_cast %91 : vector<1x16x8xf32> to vector<16x8xf32>
    %93 = vector.shape_cast %90 : vector<16x8xf32> to vector<1x16x8xf32>
    tpu.vector_store %arg17[%c0_41, %c0_42, %c0_43], %93 {strides = array<i32>} : memref<1x16x8xf32, #tpu.memory_space<vmem>>, vector<1x16x8xf32>,
    return
  }
  func.func @transform_0(%arg0: i32) -> (i32, i32, i32) {
    %c0_i32 = arith.constant 0 : i32
    %c0_i32_0 = arith.constant 0 : i32
    %c0_i32_1 = arith.constant 0 : i32
    return %arg0, %c0_i32, %c0_i32_0 : i32, i32, i32
  }
  func.func @transform_1(%arg0: i32) -> (i32, i32) {
    %c0_i32 = arith.constant 0 : i32
    %c0_i32_0 = arith.constant 0 : i32
    %c0_i32_1 = arith.constant 0 : i32
    return %c0_i32, %c0_i32_0 : i32, i32
  }
  func.func @transform_2(%arg0: i32) -> (i32, i32) {
    %c0_i32 = arith.constant 0 : i32
    %c0_i32_0 = arith.constant 0 : i32
    %c0_i32_1 = arith.constant 0 : i32
    return %c0_i32, %c0_i32_0 : i32, i32
  }
  func.func @transform_3(%arg0: i32) -> (i32, i32) {
    %c0_i32 = arith.constant 0 : i32
    %c0_i32_0 = arith.constant 0 : i32
    %c0_i32_1 = arith.constant 0 : i32
    return %c0_i32, %c0_i32_0 : i32, i32
  }
  func.func @transform_4(%arg0: i32) -> (i32, i32) {
    %c0_i32 = arith.constant 0 : i32
    %c0_i32_0 = arith.constant 0 : i32
    %c0_i32_1 = arith.constant 0 : i32
    return %c0_i32, %c0_i32_0 : i32, i32
  }
  func.func @transform_5(%arg0: i32) -> (i32, i32) {
    %c0_i32 = arith.constant 0 : i32
    %c0_i32_0 = arith.constant 0 : i32
    %c0_i32_1 = arith.constant 0 : i32
    return %c0_i32, %c0_i32_0 : i32, i32
  }
  func.func @transform_6(%arg0: i32) -> (i32, i32) {
    %c0_i32 = arith.constant 0 : i32
    %c0_i32_0 = arith.constant 0 : i32
    %c0_i32_1 = arith.constant 0 : i32
    return %c0_i32, %c0_i32_0 : i32, i32
  }
  func.func @transform_7(%arg0: i32) -> (i32, i32) {
    %c0_i32 = arith.constant 0 : i32
    %c0_i32_0 = arith.constant 0 : i32
    %c0_i32_1 = arith.constant 0 : i32
    return %c0_i32, %c0_i32_0 : i32, i32
  }
  func.func @transform_8(%arg0: i32) -> (i32, i32) {
    %c0_i32 = arith.constant 0 : i32
    %c0_i32_0 = arith.constant 0 : i32
    %c0_i32_1 = arith.constant 0 : i32
    return %c0_i32, %c0_i32_0 : i32, i32
  }
  func.func @transform_9(%arg0: i32) -> (i32, i32) {
    %c0_i32 = arith.constant 0 : i32
    %c0_i32_0 = arith.constant 0 : i32
    %c0_i32_1 = arith.constant 0 : i32
    return %c0_i32, %c0_i32_0 : i32, i32
  }
  func.func @transform_10(%arg0: i32) -> (i32, i32) {
    %c0_i32 = arith.constant 0 : i32
    %c0_i32_0 = arith.constant 0 : i32
    %c0_i32_1 = arith.constant 0 : i32
    return %c0_i32, %c0_i32_0 : i32, i32
  }
  func.func @transform_11(%arg0: i32) -> (i32, i32) {
    %c0_i32 = arith.constant 0 : i32
    %c0_i32_0 = arith.constant 0 : i32
    %c0_i32_1 = arith.constant 0 : i32
    return %c0_i32, %c0_i32_0 : i32, i32
  }
  func.func @transform_12(%arg0: i32) -> (i32, i32) {
    %c0_i32 = arith.constant 0 : i32
    %c0_i32_0 = arith.constant 0 : i32
    %c0_i32_1 = arith.constant 0 : i32
    return %c0_i32, %c0_i32_0 : i32, i32
  }
  func.func @transform_13(%arg0: i32) -> (i32, i32) {
    %c0_i32 = arith.constant 0 : i32
    %c0_i32_0 = arith.constant 0 : i32
    %c0_i32_1 = arith.constant 0 : i32
    return %c0_i32, %c0_i32_0 : i32, i32
  }
  func.func @transform_14(%arg0: i32) -> (i32, i32) {
    %c0_i32 = arith.constant 0 : i32
    %c0_i32_0 = arith.constant 0 : i32
    %c0_i32_1 = arith.constant 0 : i32
    return %c0_i32, %c0_i32_0 : i32, i32
  }
  func.func @transform_15(%arg0: i32) -> (i32, i32) {
    %c0_i32 = arith.constant 0 : i32
    %c0_i32_0 = arith.constant 0 : i32
    %c0_i32_1 = arith.constant 0 : i32
    return %c0_i32, %c0_i32_0 : i32, i32
  }
  func.func @transform_16(%arg0: i32) -> (i32, i32, i32) {
    %c0_i32 = arith.constant 0 : i32
    %c0_i32_0 = arith.constant 0 : i32
    %c0_i32_1 = arith.constant 0 : i32
    return %arg0, %c0_i32, %c0_i32_0 : i32, i32, i32
  }
}

</mosaic_0001>

<llo_original>
// kernel: tpu_custom_call.1
$region0: #{tpu_custom_call.1}
  #allocation0 [shape = 'u32[]', space=smem, size = 0x4, offset = 0x4, fixed_abs, tag = 'smem constant byte address 0x4 - core index']
  #allocation1 [shape = 'u32[144,128]{1,0:T(1,128)}', space=vmem, size = 0x12000, scoped, tag = 'internal scratch']
  %s0 = inlined_call_operand.vmem [shape: f32[2,16,8], index: 0, kind: input, shape index: {}]
  %s1 = inlined_call_operand.vmem [shape: bf16[40,32], index: 1, kind: input, shape index: {}]
  %s2 = inlined_call_operand.vmem [shape: f32[1,32], index: 2, kind: input, shape index: {}]
  %s3 = inlined_call_operand.vmem [shape: f32[1,32], index: 3, kind: input, shape index: {}]
  %s4 = inlined_call_operand.vmem [shape: bf16[160,32], index: 4, kind: input, shape index: {}]
  %s5 = inlined_call_operand.vmem [shape: f32[1,32], index: 5, kind: input, shape index: {}]
  %s6 = inlined_call_operand.vmem [shape: f32[1,32], index: 6, kind: input, shape index: {}]
  %s7 = inlined_call_operand.vmem [shape: bf16[160,32], index: 7, kind: input, shape index: {}]
  %s8 = inlined_call_operand.vmem [shape: f32[1,32], index: 8, kind: input, shape index: {}]
  %s9 = inlined_call_operand.vmem [shape: f32[1,32], index: 9, kind: input, shape index: {}]
  %s10 = inlined_call_operand.vmem [shape: bf16[160,32], index: 10, kind: input, shape index: {}]
  %s11 = inlined_call_operand.vmem [shape: f32[1,32], index: 11, kind: input, shape index: {}]
  %s12 = inlined_call_operand.vmem [shape: f32[1,32], index: 12, kind: input, shape index: {}]
  %s13 = inlined_call_operand.vmem [shape: bf16[160,8], index: 13, kind: input, shape index: {}]
  %s14 = inlined_call_operand.vmem [shape: f32[1,8], index: 14, kind: input, shape index: {}]
  %s15 = inlined_call_operand.vmem [shape: f32[1,8], index: 15, kind: input, shape index: {}]
  %s16 = inlined_call_operand.vmem [shape: f32[2,16,8], index: 16, kind: output, shape index: {}]
  %s17 = sld [smem:[#allocation0]]
  $region97: #{tpu_custom_call.1} parent=0
    _
  %s19 = ssub.s32 1, %s17
  %s20 = scalar_select 0, %s19, %s17
  loop: start=0, step=1, limit=4
  $region2: #{tpu_custom_call.1} parent=0 // loop_pre_header
    _
  $region3: #{tpu_custom_call.1} parent=0 // loop_header
    %s22 = sphi 0, %s26
    %p23 = scmp.ge.s32.totalorder %s22, 4
    %s32 = sphi 0, %s34
    %s35 = sphi 0, %s32
    %s36 = sphi 0, %s35
    %s52 = sphi 0, %s36
    %s56 = sphi 0, %s56
    %s58 = sphi 0, %s56
    %s59 = sphi 0, %s58
    %s73 = sphi 0, %s59
    %s77 = sphi 0, %s77
    %s79 = sphi 0, %s77
    %s80 = sphi 0, %s79
    %s94 = sphi 0, %s80
    %s98 = sphi 0, %s98
    %s100 = sphi 0, %s98
    %s101 = sphi 0, %s100
    %s115 = sphi 0, %s101
    %s119 = sphi 0, %s119
    %s121 = sphi 0, %s119
    %s122 = sphi 0, %s121
    %s136 = sphi 0, %s122
    %s140 = sphi 0, %s140
    %s142 = sphi 0, %s140
    %s143 = sphi 0, %s142
    %s157 = sphi 0, %s143
    %s161 = sphi 0, %s161
    %s163 = sphi 0, %s161
    %s164 = sphi 0, %s163
    %s178 = sphi 0, %s164
    %s182 = sphi 0, %s182
    %s184 = sphi 0, %s182
    %s185 = sphi 0, %s184
    %s199 = sphi 0, %s185
    %s203 = sphi 0, %s203
    %s205 = sphi 0, %s203
    %s206 = sphi 0, %s205
    %s220 = sphi 0, %s206
    %s224 = sphi 0, %s224
    %s226 = sphi 0, %s224
    %s227 = sphi 0, %s226
    %s241 = sphi 0, %s227
    %s245 = sphi 0, %s245
    %s247 = sphi 0, %s245
    %s248 = sphi 0, %s247
    %s262 = sphi 0, %s248
    %s266 = sphi 0, %s266
    %s268 = sphi 0, %s266
    %s269 = sphi 0, %s268
    %s283 = sphi 0, %s269
    %s287 = sphi 0, %s287
    %s289 = sphi 0, %s287
    %s290 = sphi 0, %s289
    %s304 = sphi 0, %s290
    %s308 = sphi 0, %s308
    %s310 = sphi 0, %s308
    %s311 = sphi 0, %s310
    %s325 = sphi 0, %s311
    %s329 = sphi 0, %s329
    %s331 = sphi 0, %s329
    %s332 = sphi 0, %s331
    %s346 = sphi 0, %s332
    %s350 = sphi 0, %s350
    %s352 = sphi 0, %s350
    %s353 = sphi 0, %s352
    %s367 = sphi 0, %s353
    %s373 = sphi 0, %s375
    %s376 = sphi 0, %s373
    %s377 = sphi 0, %s376
    %s393 = sphi 0, %s377
  $region4: #{tpu_custom_call.1} parent=0 // loop_header_branch
    %25 = sbr.rel (%p23) target = $region8
  $region5: #{tpu_custom_call.1} parent=0 // loop_body
    %s27 = ssub.s32 %s22, 1
    %s28 = ssub.s32 %s22, 2
    %s29 = sadd.s32 %s22, 1
    %s30 = ssub.s32 %s22, %s29
    %p31 = scmp.eq.s32.totalorder %s30, 0
    %s33 = sadd.s32 %s32, 1
    %s34 = scalar_select %p31, %s32, %s33
    %p37 = pneg %p31
    %p38 = scmp.eq.s32.totalorder %s22, 1
    %p39 = por %p37, %p38
    %p40 = scmp.ne.s32.totalorder %s32, %s35
    %p41 = scmp.eq.s32.totalorder %s22, 0
    %p42 = por %p40, %p41
    %p43 = scmp.ne.s32.totalorder %s32, %s35
    %p44 = scmp.eq.s32.totalorder %s27, 1
    %p45 = por %p43, %p44
    %p46 = scmp.ne.s32.totalorder %s35, %s36
    %p47 = scmp.eq.s32.totalorder %s27, 0
    %p48 = por %p46, %p47
    %p49 = scmp.ne.s32.totalorder %s35, %s36
    %p50 = scmp.eq.s32.totalorder %s28, 1
    %p51 = por %p49, %p50
    %p53 = scmp.ne.s32.totalorder %s36, %s52
    %p54 = scmp.eq.s32.totalorder %s28, 0
    %p55 = por %p53, %p54
    %s57 = sadd.s32 %s56, 1
    %p60 = scmp.eq.s32.totalorder %s22, 1
    %p61 = scmp.ne.s32.totalorder %s56, %s58
    %p62 = scmp.eq.s32.totalorder %s22, 0
    %p63 = por %p61, %p62
    %p64 = scmp.ne.s32.totalorder %s56, %s58
    %p65 = scmp.eq.s32.totalorder %s27, 1
    %p66 = por %p64, %p65
    %p67 = scmp.ne.s32.totalorder %s58, %s59
    %p68 = scmp.eq.s32.totalorder %s27, 0
    %p69 = por %p67, %p68
    %p70 = scmp.ne.s32.totalorder %s58, %s59
    %p71 = scmp.eq.s32.totalorder %s28, 1
    %p72 = por %p70, %p71
    %p74 = scmp.ne.s32.totalorder %s59, %s73
    %p75 = scmp.eq.s32.totalorder %s28, 0
    %p76 = por %p74, %p75
    %s78 = sadd.s32 %s77, 1
    %p81 = scmp.eq.s32.totalorder %s22, 1
    %p82 = scmp.ne.s32.totalorder %s77, %s79
    %p83 = scmp.eq.s32.totalorder %s22, 0
    %p84 = por %p82, %p83
    %p85 = scmp.ne.s32.totalorder %s77, %s79
    %p86 = scmp.eq.s32.totalorder %s27, 1
    %p87 = por %p85, %p86
    %p88 = scmp.ne.s32.totalorder %s79, %s80
    %p89 = scmp.eq.s32.totalorder %s27, 0
    %p90 = por %p88, %p89
    %p91 = scmp.ne.s32.totalorder %s79, %s80
    %p92 = scmp.eq.s32.totalorder %s28, 1
    %p93 = por %p91, %p92
    %p95 = scmp.ne.s32.totalorder %s80, %s94
    %p96 = scmp.eq.s32.totalorder %s28, 0
    %p97 = por %p95, %p96
    %s99 = sadd.s32 %s98, 1
    %p102 = scmp.eq.s32.totalorder %s22, 1
    %p103 = scmp.ne.s32.totalorder %s98, %s100
    %p104 = scmp.eq.s32.totalorder %s22, 0
    %p105 = por %p103, %p104
    %p106 = scmp.ne.s32.totalorder %s98, %s100
    %p107 = scmp.eq.s32.totalorder %s27, 1
    %p108 = por %p106, %p107
    %p109 = scmp.ne.s32.totalorder %s100, %s101
    %p110 = scmp.eq.s32.totalorder %s27, 0
    %p111 = por %p109, %p110
    %p112 = scmp.ne.s32.totalorder %s100, %s101
    %p113 = scmp.eq.s32.totalorder %s28, 1
    %p114 = por %p112, %p113
    %p116 = scmp.ne.s32.totalorder %s101, %s115
    %p117 = scmp.eq.s32.totalorder %s28, 0
    %p118 = por %p116, %p117
    %s120 = sadd.s32 %s119, 1
    %p123 = scmp.eq.s32.totalorder %s22, 1
    %p124 = scmp.ne.s32.totalorder %s119, %s121
    %p125 = scmp.eq.s32.totalorder %s22, 0
    %p126 = por %p124, %p125
    %p127 = scmp.ne.s32.totalorder %s119, %s121
    %p128 = scmp.eq.s32.totalorder %s27, 1
    %p129 = por %p127, %p128
    %p130 = scmp.ne.s32.totalorder %s121, %s122
    %p131 = scmp.eq.s32.totalorder %s27, 0
    %p132 = por %p130, %p131
    %p133 = scmp.ne.s32.totalorder %s121, %s122
    %p134 = scmp.eq.s32.totalorder %s28, 1
    %p135 = por %p133, %p134
    %p137 = scmp.ne.s32.totalorder %s122, %s136
    %p138 = scmp.eq.s32.totalorder %s28, 0
    %p139 = por %p137, %p138
    %s141 = sadd.s32 %s140, 1
    %p144 = scmp.eq.s32.totalorder %s22, 1
    %p145 = scmp.ne.s32.totalorder %s140, %s142
    %p146 = scmp.eq.s32.totalorder %s22, 0
    %p147 = por %p145, %p146
    %p148 = scmp.ne.s32.totalorder %s140, %s142
    %p149 = scmp.eq.s32.totalorder %s27, 1
    %p150 = por %p148, %p149
    %p151 = scmp.ne.s32.totalorder %s142, %s143
    %p152 = scmp.eq.s32.totalorder %s27, 0
    %p153 = por %p151, %p152
    %p154 = scmp.ne.s32.totalorder %s142, %s143
    %p155 = scmp.eq.s32.totalorder %s28, 1
    %p156 = por %p154, %p155
    %p158 = scmp.ne.s32.totalorder %s143, %s157
    %p159 = scmp.eq.s32.totalorder %s28, 0
    %p160 = por %p158, %p159
    %s162 = sadd.s32 %s161, 1
    %p165 = scmp.eq.s32.totalorder %s22, 1
    %p166 = scmp.ne.s32.totalorder %s161, %s163
    %p167 = scmp.eq.s32.totalorder %s22, 0
    %p168 = por %p166, %p167
    %p169 = scmp.ne.s32.totalorder %s161, %s163
    %p170 = scmp.eq.s32.totalorder %s27, 1
    %p171 = por %p169, %p170
    %p172 = scmp.ne.s32.totalorder %s163, %s164
    %p173 = scmp.eq.s32.totalorder %s27, 0
    %p174 = por %p172, %p173
    %p175 = scmp.ne.s32.totalorder %s163, %s164
    %p176 = scmp.eq.s32.totalorder %s28, 1
    %p177 = por %p175, %p176
    %p179 = scmp.ne.s32.totalorder %s164, %s178
    %p180 = scmp.eq.s32.totalorder %s28, 0
    %p181 = por %p179, %p180
    %s183 = sadd.s32 %s182, 1
    %p186 = scmp.eq.s32.totalorder %s22, 1
    %p187 = scmp.ne.s32.totalorder %s182, %s184
    %p188 = scmp.eq.s32.totalorder %s22, 0
    %p189 = por %p187, %p188
    %p190 = scmp.ne.s32.totalorder %s182, %s184
    %p191 = scmp.eq.s32.totalorder %s27, 1
    %p192 = por %p190, %p191
    %p193 = scmp.ne.s32.totalorder %s184, %s185
    %p194 = scmp.eq.s32.totalorder %s27, 0
    %p195 = por %p193, %p194
    %p196 = scmp.ne.s32.totalorder %s184, %s185
    %p197 = scmp.eq.s32.totalorder %s28, 1
    %p198 = por %p196, %p197
    %p200 = scmp.ne.s32.totalorder %s185, %s199
    %p201 = scmp.eq.s32.totalorder %s28, 0
    %p202 = por %p200, %p201
    %s204 = sadd.s32 %s203, 1
    %p207 = scmp.eq.s32.totalorder %s22, 1
    %p208 = scmp.ne.s32.totalorder %s203, %s205
    %p209 = scmp.eq.s32.totalorder %s22, 0
    %p210 = por %p208, %p209
    %p211 = scmp.ne.s32.totalorder %s203, %s205
    %p212 = scmp.eq.s32.totalorder %s27, 1
    %p213 = por %p211, %p212
    %p214 = scmp.ne.s32.totalorder %s205, %s206
    %p215 = scmp.eq.s32.totalorder %s27, 0
    %p216 = por %p214, %p215
    %p217 = scmp.ne.s32.totalorder %s205, %s206
    %p218 = scmp.eq.s32.totalorder %s28, 1
    %p219 = por %p217, %p218
    %p221 = scmp.ne.s32.totalorder %s206, %s220
    %p222 = scmp.eq.s32.totalorder %s28, 0
    %p223 = por %p221, %p222
    %s225 = sadd.s32 %s224, 1
    %p228 = scmp.eq.s32.totalorder %s22, 1
    %p229 = scmp.ne.s32.totalorder %s224, %s226
    %p230 = scmp.eq.s32.totalorder %s22, 0
    %p231 = por %p229, %p230
    %p232 = scmp.ne.s32.totalorder %s224, %s226
    %p233 = scmp.eq.s32.totalorder %s27, 1
    %p234 = por %p232, %p233
    %p235 = scmp.ne.s32.totalorder %s226, %s227
    %p236 = scmp.eq.s32.totalorder %s27, 0
    %p237 = por %p235, %p236
    %p238 = scmp.ne.s32.totalorder %s226, %s227
    %p239 = scmp.eq.s32.totalorder %s28, 1
    %p240 = por %p238, %p239
    %p242 = scmp.ne.s32.totalorder %s227, %s241
    %p243 = scmp.eq.s32.totalorder %s28, 0
    %p244 = por %p242, %p243
    %s246 = sadd.s32 %s245, 1
    %p249 = scmp.eq.s32.totalorder %s22, 1
    %p250 = scmp.ne.s32.totalorder %s245, %s247
    %p251 = scmp.eq.s32.totalorder %s22, 0
    %p252 = por %p250, %p251
    %p253 = scmp.ne.s32.totalorder %s245, %s247
    %p254 = scmp.eq.s32.totalorder %s27, 1
    %p255 = por %p253, %p254
    %p256 = scmp.ne.s32.totalorder %s247, %s248
    %p257 = scmp.eq.s32.totalorder %s27, 0
    %p258 = por %p256, %p257
    %p259 = scmp.ne.s32.totalorder %s247, %s248
    %p260 = scmp.eq.s32.totalorder %s28, 1
    %p261 = por %p259, %p260
    %p263 = scmp.ne.s32.totalorder %s248, %s262
    %p264 = scmp.eq.s32.totalorder %s28, 0
    %p265 = por %p263, %p264
    %s267 = sadd.s32 %s266, 1
    %p270 = scmp.eq.s32.totalorder %s22, 1
    %p271 = scmp.ne.s32.totalorder %s266, %s268
    %p272 = scmp.eq.s32.totalorder %s22, 0
    %p273 = por %p271, %p272
    %p274 = scmp.ne.s32.totalorder %s266, %s268
    %p275 = scmp.eq.s32.totalorder %s27, 1
    %p276 = por %p274, %p275
    %p277 = scmp.ne.s32.totalorder %s268, %s269
    %p278 = scmp.eq.s32.totalorder %s27, 0
    %p279 = por %p277, %p278
    %p280 = scmp.ne.s32.totalorder %s268, %s269
    %p281 = scmp.eq.s32.totalorder %s28, 1
    %p282 = por %p280, %p281
    %p284 = scmp.ne.s32.totalorder %s269, %s283
    %p285 = scmp.eq.s32.totalorder %s28, 0
    %p286 = por %p284, %p285
    %s288 = sadd.s32 %s287, 1
    %p291 = scmp.eq.s32.totalorder %s22, 1
    %p292 = scmp.ne.s32.totalorder %s287, %s289
    %p293 = scmp.eq.s32.totalorder %s22, 0
    %p294 = por %p292, %p293
    %p295 = scmp.ne.s32.totalorder %s287, %s289
    %p296 = scmp.eq.s32.totalorder %s27, 1
    %p297 = por %p295, %p296
    %p298 = scmp.ne.s32.totalorder %s289, %s290
    %p299 = scmp.eq.s32.totalorder %s27, 0
    %p300 = por %p298, %p299
    %p301 = scmp.ne.s32.totalorder %s289, %s290
    %p302 = scmp.eq.s32.totalorder %s28, 1
    %p303 = por %p301, %p302
    %p305 = scmp.ne.s32.totalorder %s290, %s304
    %p306 = scmp.eq.s32.totalorder %s28, 0
    %p307 = por %p305, %p306
    %s309 = sadd.s32 %s308, 1
    %p312 = scmp.eq.s32.totalorder %s22, 1
    %p313 = scmp.ne.s32.totalorder %s308, %s310
    %p314 = scmp.eq.s32.totalorder %s22, 0
    %p315 = por %p313, %p314
    %p316 = scmp.ne.s32.totalorder %s308, %s310
    %p317 = scmp.eq.s32.totalorder %s27, 1
    %p318 = por %p316, %p317
    %p319 = scmp.ne.s32.totalorder %s310, %s311
    %p320 = scmp.eq.s32.totalorder %s27, 0
    %p321 = por %p319, %p320
    %p322 = scmp.ne.s32.totalorder %s310, %s311
    %p323 = scmp.eq.s32.totalorder %s28, 1
    %p324 = por %p322, %p323
    %p326 = scmp.ne.s32.totalorder %s311, %s325
    %p327 = scmp.eq.s32.totalorder %s28, 0
    %p328 = por %p326, %p327
    %s330 = sadd.s32 %s329, 1
    %p333 = scmp.eq.s32.totalorder %s22, 1
    %p334 = scmp.ne.s32.totalorder %s329, %s331
    %p335 = scmp.eq.s32.totalorder %s22, 0
    %p336 = por %p334, %p335
    %p337 = scmp.ne.s32.totalorder %s329, %s331
    %p338 = scmp.eq.s32.totalorder %s27, 1
    %p339 = por %p337, %p338
    %p340 = scmp.ne.s32.totalorder %s331, %s332
    %p341 = scmp.eq.s32.totalorder %s27, 0
    %p342 = por %p340, %p341
    %p343 = scmp.ne.s32.totalorder %s331, %s332
    %p344 = scmp.eq.s32.totalorder %s28, 1
    %p345 = por %p343, %p344
    %p347 = scmp.ne.s32.totalorder %s332, %s346
    %p348 = scmp.eq.s32.totalorder %s28, 0
    %p349 = por %p347, %p348
    %s351 = sadd.s32 %s350, 1
    %p354 = scmp.eq.s32.totalorder %s22, 1
    %p355 = scmp.ne.s32.totalorder %s350, %s352
    %p356 = scmp.eq.s32.totalorder %s22, 0
    %p357 = por %p355, %p356
    %p358 = scmp.ne.s32.totalorder %s350, %s352
    %p359 = scmp.eq.s32.totalorder %s27, 1
    %p360 = por %p358, %p359
    %p361 = scmp.ne.s32.totalorder %s352, %s353
    %p362 = scmp.eq.s32.totalorder %s27, 0
    %p363 = por %p361, %p362
    %p364 = scmp.ne.s32.totalorder %s352, %s353
    %p365 = scmp.eq.s32.totalorder %s28, 1
    %p366 = por %p364, %p365
    %p368 = scmp.ne.s32.totalorder %s353, %s367
    %p369 = scmp.eq.s32.totalorder %s28, 0
    %p370 = por %p368, %p369
    %s371 = ssub.s32 %s22, %s29
    %p372 = scmp.eq.s32.totalorder %s371, 0
    %s374 = sadd.s32 %s373, 1
    %s375 = scalar_select %p372, %s373, %s374
    %p378 = pneg %p372
    %p379 = scmp.eq.s32.totalorder %s22, 1
    %p380 = por %p378, %p379
    %p381 = scmp.ne.s32.totalorder %s373, %s376
    %p382 = scmp.eq.s32.totalorder %s22, 0
    %p383 = por %p381, %p382
    %p384 = scmp.ne.s32.totalorder %s373, %s376
    %p385 = scmp.eq.s32.totalorder %s27, 1
    %p386 = por %p384, %p385
    %p387 = scmp.ne.s32.totalorder %s376, %s377
    %p388 = scmp.eq.s32.totalorder %s27, 0
    %p389 = por %p387, %p388
    %p390 = scmp.ne.s32.totalorder %s376, %s377
    %p391 = scmp.eq.s32.totalorder %s28, 1
    %p392 = por %p390, %p391
    %p394 = scmp.ne.s32.totalorder %s377, %s393
    %p395 = scmp.eq.s32.totalorder %s28, 0
    %p396 = por %p394, %p395
    %p397 = scmp.le.s32.totalorder 1, %s22
    %p398 = scmp.lt.s32.totalorder %s22, 3
    %p399 = pnand %p397, %p398
    %p400 = pneg %p399
    // Predicated region
    $region9: #{tpu_custom_call.1} parent=5 // pred_check
      _
    $region10: #{tpu_custom_call.1} parent=5 // pred_check_branch
      %402 = sbr.rel (%p399) target = $region12
    $region11: #{tpu_custom_call.1} parent=5 // pred_region
      %s403 = ssub.s32 %s22, 1
      // Predicated region
      $region13: #{tpu_custom_call.1} parent=11 // pred_check
        %p404 = pneg %p69
      $region14: #{tpu_custom_call.1} parent=11 // pred_check_branch
        %406 = sbr.rel (%p404) target = $region16
      $region15: #{tpu_custom_call.1} parent=11 // pred_region
        _
      $region16: #{tpu_custom_call.1} parent=11 // pred_fallthru
        _
      // Predicated region
      $region17: #{tpu_custom_call.1} parent=11 // pred_check
        %p407 = pneg %p90
      $region18: #{tpu_custom_call.1} parent=11 // pred_check_branch
        %409 = sbr.rel (%p407) target = $region20
      $region19: #{tpu_custom_call.1} parent=11 // pred_region
        _
      $region20: #{tpu_custom_call.1} parent=11 // pred_fallthru
        _
      // Predicated region
      $region21: #{tpu_custom_call.1} parent=11 // pred_check
        %p410 = pneg %p111
      $region22: #{tpu_custom_call.1} parent=11 // pred_check_branch
        %412 = sbr.rel (%p410) target = $region24
      $region23: #{tpu_custom_call.1} parent=11 // pred_region
        _
      $region24: #{tpu_custom_call.1} parent=11 // pred_fallthru
        _
      // Predicated region
      $region25: #{tpu_custom_call.1} parent=11 // pred_check
        %p413 = pneg %p132
      $region26: #{tpu_custom_call.1} parent=11 // pred_check_branch
        %415 = sbr.rel (%p413) target = $region28
      $region27: #{tpu_custom_call.1} parent=11 // pred_region
        _
      $region28: #{tpu_custom_call.1} parent=11 // pred_fallthru
        _
      // Predicated region
      $region29: #{tpu_custom_call.1} parent=11 // pred_check
        %p416 = pneg %p153
      $region30: #{tpu_custom_call.1} parent=11 // pred_check_branch
        %418 = sbr.rel (%p416) target = $region32
      $region31: #{tpu_custom_call.1} parent=11 // pred_region
        _
      $region32: #{tpu_custom_call.1} parent=11 // pred_fallthru
        _
      // Predicated region
      $region33: #{tpu_custom_call.1} parent=11 // pred_check
        %p419 = pneg %p174
      $region34: #{tpu_custom_call.1} parent=11 // pred_check_branch
        %421 = sbr.rel (%p419) target = $region36
      $region35: #{tpu_custom_call.1} parent=11 // pred_region
        _
      $region36: #{tpu_custom_call.1} parent=11 // pred_fallthru
        _
      // Predicated region
      $region37: #{tpu_custom_call.1} parent=11 // pred_check
        %p422 = pneg %p195
      $region38: #{tpu_custom_call.1} parent=11 // pred_check_branch
        %424 = sbr.rel (%p422) target = $region40
      $region39: #{tpu_custom_call.1} parent=11 // pred_region
        _
      $region40: #{tpu_custom_call.1} parent=11 // pred_fallthru
        _
      // Predicated region
      $region41: #{tpu_custom_call.1} parent=11 // pred_check
        %p425 = pneg %p216
      $region42: #{tpu_custom_call.1} parent=11 // pred_check_branch
        %427 = sbr.rel (%p425) target = $region44
      $region43: #{tpu_custom_call.1} parent=11 // pred_region
        _
      $region44: #{tpu_custom_call.1} parent=11 // pred_fallthru
        _
      // Predicated region
      $region45: #{tpu_custom_call.1} parent=11 // pred_check
        %p428 = pneg %p237
      $region46: #{tpu_custom_call.1} parent=11 // pred_check_branch
        %430 = sbr.rel (%p428) target = $region48
      $region47: #{tpu_custom_call.1} parent=11 // pred_region
        _
      $region48: #{tpu_custom_call.1} parent=11 // pred_fallthru
        _
      // Predicated region
      $region49: #{tpu_custom_call.1} parent=11 // pred_check
        %p431 = pneg %p258
      $region50: #{tpu_custom_call.1} parent=11 // pred_check_branch
        %433 = sbr.rel (%p431) target = $region52
      $region51: #{tpu_custom_call.1} parent=11 // pred_region
        _
      $region52: #{tpu_custom_call.1} parent=11 // pred_fallthru
        _
      // Predicated region
      $region53: #{tpu_custom_call.1} parent=11 // pred_check
        %p434 = pneg %p279
      $region54: #{tpu_custom_call.1} parent=11 // pred_check_branch
        %436 = sbr.rel (%p434) target = $region56
      $region55: #{tpu_custom_call.1} parent=11 // pred_region
        _
      $region56: #{tpu_custom_call.1} parent=11 // pred_fallthru
        _
      // Predicated region
      $region57: #{tpu_custom_call.1} parent=11 // pred_check
        %p437 = pneg %p300
      $region58: #{tpu_custom_call.1} parent=11 // pred_check_branch
        %439 = sbr.rel (%p437) target = $region60
      $region59: #{tpu_custom_call.1} parent=11 // pred_region
        _
      $region60: #{tpu_custom_call.1} parent=11 // pred_fallthru
        _
      // Predicated region
      $region61: #{tpu_custom_call.1} parent=11 // pred_check
        %p440 = pneg %p321
      $region62: #{tpu_custom_call.1} parent=11 // pred_check_branch
        %442 = sbr.rel (%p440) target = $region64
      $region63: #{tpu_custom_call.1} parent=11 // pred_region
        _
      $region64: #{tpu_custom_call.1} parent=11 // pred_fallthru
        _
      // Predicated region
      $region65: #{tpu_custom_call.1} parent=11 // pred_check
        %p443 = pneg %p342
      $region66: #{tpu_custom_call.1} parent=11 // pred_check_branch
        %445 = sbr.rel (%p443) target = $region68
      $region67: #{tpu_custom_call.1} parent=11 // pred_region
        _
      $region68: #{tpu_custom_call.1} parent=11 // pred_fallthru
        _
      // Predicated region
      $region69: #{tpu_custom_call.1} parent=11 // pred_check
        %p446 = pneg %p363
      $region70: #{tpu_custom_call.1} parent=11 // pred_check_branch
        %448 = sbr.rel (%p446) target = $region72
      $region71: #{tpu_custom_call.1} parent=11 // pred_region
        _
      $region72: #{tpu_custom_call.1} parent=11 // pred_fallthru
        _
    $region12: #{tpu_custom_call.1} parent=5 // pred_fallthru
      _
    %p449 = scmp.lt.s32.totalorder %s22, 2
    // Predicated region
    $region73: #{tpu_custom_call.1} parent=5 // pred_check
      %p450 = pneg %p449
    $region74: #{tpu_custom_call.1} parent=5 // pred_check_branch
      %452 = sbr.rel (%p450) target = $region76
    $region75: #{tpu_custom_call.1} parent=5 // pred_region
      // Predicated region
      $region77: #{tpu_custom_call.1} parent=75 // pred_check
        %p453 = pneg %p42
      $region78: #{tpu_custom_call.1} parent=75 // pred_check_branch
        %455 = sbr.rel (%p453) target = $region80
      $region79: #{tpu_custom_call.1} parent=75 // pred_region
        %p456 = scmp.lt.s32.totalorder %s22, 1
        %s457 = scalar_select %p456, %s22, 1
        %s458 = smul.addr %s457, 2
        %s459 = smul.addr %s458, 8
        %s460 = scalar_lea.vmem %s0, %s459
      $region80: #{tpu_custom_call.1} parent=75 // pred_fallthru
        _
    $region76: #{tpu_custom_call.1} parent=5 // pred_fallthru
      _
    %p461 = scmp.le.s32.totalorder 1, %s22
    %p462 = scmp.lt.s32.totalorder %s22, 3
    %p463 = pnand %p461, %p462
    %p464 = pneg %p463
    // Predicated region
    $region81: #{tpu_custom_call.1} parent=5 // pred_check
      _
    $region82: #{tpu_custom_call.1} parent=5 // pred_check_branch
      %466 = sbr.rel (%p463) target = $region84
    $region83: #{tpu_custom_call.1} parent=5 // pred_region
      %s467 = ssub.s32 %s22, 1
      %p468 = scmp.lt.s32.totalorder %s27, 1
      %s469 = scalar_select %p468, %s27, 1
      %s470 = smul.addr %s469, 2
      %s471 = smul.addr %s470, 8
      %s472 = scalar_lea.vmem %s0, %s471
      %p473 = pneg %p48
      %p474 = pneg %p45
      %p475 = pneg %p69
      %p476 = pneg %p66
      %p477 = pneg %p90
      %p478 = pneg %p87
      %p479 = pneg %p111
      %p480 = pneg %p108
      %p481 = pneg %p132
      %p482 = pneg %p129
      %p483 = pneg %p153
      %p484 = pneg %p150
      %p485 = pneg %p174
      %p486 = pneg %p171
      %p487 = pneg %p195
      %p488 = pneg %p192
      %p489 = pneg %p216
      %p490 = pneg %p213
      %p491 = pneg %p237
      %p492 = pneg %p234
      %p493 = pneg %p258
      %p494 = pneg %p255
      %p495 = pneg %p279
      %p496 = pneg %p276
      %p497 = pneg %p300
      %p498 = pneg %p297
      %p499 = pneg %p321
      %p500 = pneg %p318
      %p501 = pneg %p342
      %p502 = pneg %p339
      %p503 = pneg %p363
      %p504 = pneg %p360
      %p505 = pneg %p389
      %p506 = pneg %p386
      %p507 = scmp.lt.s32.totalorder %s27, 1
      %s508 = scalar_select %p507, %s27, 1
      %s509 = smul.addr %s508, 2
      %s510 = smul.addr %s509, 8
      %s511 = scalar_lea.vmem %s16, %s510
      %p512 = scmp.lt.s32.totalorder %s27, 1
      %s513 = scalar_select %p512, %s27, 1
      %s514 = smul.addr %s513, 2
      %s515 = smul.addr %s514, 8
      %s516 = scalar_lea.vmem %s0, %s515
      %p517 = scmp.lt.s32.totalorder %s27, 1
      %s518 = scalar_select %p517, %s27, 1
      %s519 = smul.addr %s518, 2
      %s520 = smul.addr %s519, 8
      %s521 = scalar_lea.vmem %s16, %s520
      %v523 = vld [vmem:[%s516] sm:$0xff]
      %v524 = vld [vmem:[%s516 + $0x8] sm:$0xff]
      %v525 = vld [vmem:[%s1] sm:$0xf]
      %v526 = vld [vmem:[%s1 + $0x4] sm:$0xf]
      %v527 = vld [vmem:[%s1 + $0x8] sm:$0xf]
      %v528 = vld [vmem:[%s1 + $0xc] sm:$0xf]
      %v529 = vld [vmem:[%s1 + $0x10] sm:$0xf]
      %v530 = vld [vmem:[%s2] sm:$0x1]
      %v531 = vld [vmem:[%s3] sm:$0x1]
      %vm534 = vcmask 1041408
      %v535 = vrot.slane %v523, 6
      %v536 = vrot.slane %v524, 6
      %v537 = vsel %vm534, %v535, %v536
      %v541 = vsel %vm534, 0.0, %v535
      %v542 = vsel %vm534, %v536, 0.0
      %vm545 = vcmask 1046528
      %v546 = vrot.slane %v541, 1
      %v547 = vrot.slane %v537, 1
      %v548 = vsel %vm545, %v546, %v547
      %v549 = vrot.slane %v542, 1
      %v550 = vsel %vm545, %v547, %v549
      %551 = vrot.lane.b32.xlu0 %v548, 8
      %v552 = vpop.permute.xlu0 %551
      %553 = vrot.lane.b32.xlu0 %v550, 8
      %v554 = vpop.permute.xlu0 %553
      %vm557 = vcmask 1045504
      %v558 = vrot.slane %v541, 2
      %v559 = vrot.slane %v537, 2
      %v560 = vsel %vm557, %v558, %v559
      %v561 = vrot.slane %v542, 2
      %v562 = vsel %vm557, %v559, %v561
      %563 = vrot.lane.b32.xlu0 %v560, 16
      %v564 = vpop.permute.xlu0 %563
      %565 = vrot.lane.b32.xlu0 %v562, 16
      %v566 = vpop.permute.xlu0 %565
      %vm569 = vcmask 1044480
      %v570 = vrot.slane %v541, 3
      %v571 = vrot.slane %v537, 3
      %v572 = vsel %vm569, %v570, %v571
      %v573 = vrot.slane %v542, 3
      %v574 = vsel %vm569, %v571, %v573
      %575 = vrot.lane.b32.xlu0 %v572, 24
      %v576 = vpop.permute.xlu0 %575
      %577 = vrot.lane.b32.xlu0 %v574, 24
      %v578 = vpop.permute.xlu0 %577
      %vm581 = vcmask 1043456
      %v582 = vrot.slane %v541, 4
      %v583 = vrot.slane %v537, 4
      %v584 = vsel %vm581, %v582, %v583
      %v585 = vrot.slane %v542, 4
      %v586 = vsel %vm581, %v583, %v585
      %587 = vrot.lane.b32.xlu0 %v584, 32
      %v588 = vpop.permute.xlu0 %587
      %589 = vrot.lane.b32.xlu0 %v586, 32
      %v590 = vpop.permute.xlu0 %589
      %vm593 = vcmask 64512
      %v594 = vsel %vm593, %v541, %v552
      %v595 = vsel %vm593, %v537, %v554
      %vm596 = vcmask 130048
      %v597 = vsel %vm596, %v594, %v564
      %v598 = vsel %vm596, %v595, %v566
      %vm599 = vcmask 195584
      %v600 = vsel %vm599, %v597, %v576
      %v601 = vsel %vm599, %v598, %v578
      %vm602 = vcmask 261120
      %v603 = vsel %vm602, %v600, %v588
      %v604 = vsel %vm602, %v601, %v590
      %v605 = vpack.c.bf16 %v604, %v603
      %v611 = vunpack.c.l.b16 %v525
      %v612 = vunpack.c.l.b16 %v526
      %v613 = vunpack.c.l.b16 %v527
      %v614 = vunpack.c.l.b16 %v528
      %v615 = vunpack.c.l.b16 %v529
      %v616 = vpack.c.b16 %v612, %v611
      %v617 = vpack.c.b16 %v614, %v613
      %v618 = vpack.c.b16 %v615, %v615
      %vm621 = vcmask 326656
      %v623 = vsel %vm621, %v605, 0
      %v626 = vsel %vm581, %v618, 0
      %628 = vmatprep.subr.bf16.mxu0 0
      %629 = vmatpush1.bf16.msra.mxu0 %v616
      %630 = vmatprep.subr.bf16.mxu0 0
      %631 = vmatpush1.bf16.msra.mxu0 %v617
      %632 = vmatprep.subr.bf16.mxu0 0
      %633 = vmatpush1.bf16.msra.mxu0 %v626
      %634 = vmatprep.subr.bf16.mxu0 0
      %635 = vmatpush1.bf16.msra.mxu0 0
      %636 = vmatprep.subr.bf16.mxu0 0
      %637 = vmatpush1.bf16.msra.mxu0 0
      %638 = vmatprep.subr.bf16.mxu0 0
      %639 = vmatpush1.bf16.msra.mxu0 0
      %640 = vmatprep.subr.bf16.mxu0 0
      %641 = vmatpush1.bf16.msra.mxu0 0
      %642 = vmatprep.subr.bf16.mxu0 0
      %643 = vmatpush1.bf16.msra.mxu0 0
      %644 = vmatprep.subr.bf16.mxu0 0
      %645 = vmatpush1.bf16.msra.mxu0 0
      %646 = vmatprep.subr.bf16.mxu0 0
      %647 = vmatpush1.bf16.msra.mxu0 0
      %648 = vmatprep.subr.bf16.mxu0 0
      %649 = vmatpush1.bf16.msra.mxu0 0
      %650 = vmatprep.subr.bf16.mxu0 0
      %651 = vmatpush1.bf16.msra.mxu0 0
      %652 = vmatprep.subr.bf16.mxu0 0
      %653 = vmatpush1.bf16.msra.mxu0 0
      %654 = vmatprep.subr.bf16.mxu0 0
      %655 = vmatpush1.bf16.msra.mxu0 0
      %656 = vmatprep.subr.bf16.mxu0 0
      %657 = vmatpush1.bf16.msra.mxu0 0
      %658 = vmatprep.subr.bf16.mxu0 0
      %659 = vmatpush1.bf16.msra.mxu0 0
      %660 = vmatprep.mubr.bf16.mxu0 0
      %661 = vmatmul.mubr.bf16.gmra.mrb[0].mxu0 %v623
      %v662 = vpop.f32.mrb[0].mxu0
      %v663 = vadd.f32 0.0, %v662
      %v664 = vpop.f32.mrb[0].mxu0
      %v665 = vpop.f32.mrb[0].mxu0
      %v666 = vadd.f32 0.0, %v665
      %v667 = vpop.f32.mrb[0].mxu0
      %668 = vdwg.mxu0
      %v670 = vlaneseq
      %v671 = vshrl.u32 %v670, 7
      %v672 = vsub.s32 0, %v671
      %v673 = vrot.slane %v530, %v672
      %v675 = vmul.f32 %v663, %v673
      %v676 = vmul.f32 %v666, %v673
      %v678 = vlaneseq
      %v679 = vshrl.u32 %v678, 7
      %v680 = vsub.s32 0, %v679
      %v681 = vrot.slane %v531, %v680
      %v683 = vadd.f32 %v675, %v681
      %v684 = vadd.f32 %v676, %v681
      %v685 = vtanh.pop %v683
      %v686 = vtanh.pop %v684
      %v687 = vld [vmem:[%s4] sm:$0xf]
      %v688 = vld [vmem:[%s4 + $0x4] sm:$0xf]
      %v689 = vld [vmem:[%s4 + $0x8] sm:$0xf]
      %v690 = vld [vmem:[%s4 + $0xc] sm:$0xf]
      %v691 = vld [vmem:[%s4 + $0x10] sm:$0xf]
      %v692 = vld [vmem:[%s4 + $0x14] sm:$0xf]
      %v693 = vld [vmem:[%s4 + $0x18] sm:$0xf]
      %v694 = vld [vmem:[%s4 + $0x1c] sm:$0xf]
      %v695 = vld [vmem:[%s4 + $0x20] sm:$0xf]
      %v696 = vld [vmem:[%s4 + $0x24] sm:$0xf]
      %v697 = vld [vmem:[%s4 + $0x28] sm:$0xf]
      %v698 = vld [vmem:[%s4 + $0x2c] sm:$0xf]
      %v699 = vld [vmem:[%s4 + $0x30] sm:$0xf]
      %v700 = vld [vmem:[%s4 + $0x34] sm:$0xf]
      %v701 = vld [vmem:[%s4 + $0x38] sm:$0xf]
      %v702 = vld [vmem:[%s4 + $0x3c] sm:$0xf]
      %v703 = vld [vmem:[%s4 + $0x40] sm:$0xf]
      %v704 = vld [vmem:[%s4 + $0x44] sm:$0xf]
      %v705 = vld [vmem:[%s4 + $0x48] sm:$0xf]
      %v706 = vld [vmem:[%s4 + $0x4c] sm:$0xf]
      %v707 = vld [vmem:[%s5] sm:$0x1]
      %v708 = vld [vmem:[%s6] sm:$0x1]
      %v711 = vrot.slane %v685, 6
      %v712 = vrot.slane %v686, 6
      %v713 = vsel %vm534, %v711, %v712
      %v717 = vsel %vm534, 0.0, %v711
      %v718 = vsel %vm534, %v712, 0.0
      %v721 = vrot.slane %v717, 1
      %v722 = vrot.slane %v713, 1
      %v723 = vsel %vm545, %v721, %v722
      %v724 = vrot.slane %v718, 1
      %v725 = vsel %vm545, %v722, %v724
      %726 = vrot.lane.b32.xlu0 %v723, 32
      %v727 = vpop.permute.xlu0 %726
      %728 = vrot.lane.b32.xlu0 %v725, 32
      %v729 = vpop.permute.xlu0 %728
      %v732 = vrot.slane %v717, 2
      %v733 = vrot.slane %v713, 2
      %v734 = vsel %vm557, %v732, %v733
      %v735 = vrot.slane %v718, 2
      %v736 = vsel %vm557, %v733, %v735
      %737 = vrot.lane.b32.xlu0 %v734, 64
      %v738 = vpop.permute.xlu0 %737
      %739 = vrot.lane.b32.xlu0 %v736, 64
      %v740 = vpop.permute.xlu0 %739
      %v743 = vrot.slane %v717, 3
      %v744 = vrot.slane %v713, 3
      %v745 = vsel %vm569, %v743, %v744
      %v746 = vrot.slane %v718, 3
      %v747 = vsel %vm569, %v744, %v746
      %748 = vrot.lane.b32.xlu0 %v745, 96
      %v749 = vpop.permute.xlu0 %748
      %750 = vrot.lane.b32.xlu0 %v747, 96
      %v751 = vpop.permute.xlu0 %750
      %v754 = vrot.slane %v717, 4
      %v755 = vrot.slane %v713, 4
      %v756 = vsel %vm581, %v754, %v755
      %v757 = vrot.slane %v718, 4
      %v758 = vsel %vm581, %v755, %v757
      %v761 = vsel %vm602, %v717, %v727
      %v762 = vsel %vm602, %v713, %v729
      %vm763 = vcmask 523264
      %v764 = vsel %vm763, %v761, %v738
      %v765 = vsel %vm763, %v762, %v740
      %vm766 = vcmask 785408
      %v767 = vsel %vm766, %v764, %v749
      %v768 = vsel %vm766, %v765, %v751
      %v769 = vpack.c.bf16 %v768, %v767
      %v770 = vpack.c.bf16 %v758, %v756
      %v791 = vunpack.c.l.b16 %v687
      %v792 = vunpack.c.l.b16 %v688
      %v793 = vunpack.c.l.b16 %v689
      %v794 = vunpack.c.l.b16 %v690
      %v795 = vunpack.c.l.b16 %v691
      %v796 = vunpack.c.l.b16 %v692
      %v797 = vunpack.c.l.b16 %v693
      %v798 = vunpack.c.l.b16 %v694
      %v799 = vunpack.c.l.b16 %v695
      %v800 = vunpack.c.l.b16 %v696
      %v801 = vunpack.c.l.b16 %v697
      %v802 = vunpack.c.l.b16 %v698
      %v803 = vunpack.c.l.b16 %v699
      %v804 = vunpack.c.l.b16 %v700
      %v805 = vunpack.c.l.b16 %v701
      %v806 = vunpack.c.l.b16 %v702
      %v807 = vunpack.c.l.b16 %v703
      %v808 = vunpack.c.l.b16 %v704
      %v809 = vunpack.c.l.b16 %v705
      %v810 = vunpack.c.l.b16 %v706
      %v811 = vpack.c.b16 %v792, %v791
      %v812 = vpack.c.b16 %v794, %v793
      %v813 = vpack.c.b16 %v796, %v795
      %v814 = vpack.c.b16 %v798, %v797
      %v815 = vpack.c.b16 %v800, %v799
      %v816 = vpack.c.b16 %v802, %v801
      %v817 = vpack.c.b16 %v804, %v803
      %v818 = vpack.c.b16 %v806, %v805
      %v819 = vpack.c.b16 %v808, %v807
      %v820 = vpack.c.b16 %v810, %v809
      %v832 = vsel %vm602, %v770, 0
      %834 = vmatprep.subr.bf16.mxu0 0
      %835 = vmatpush1.bf16.msra.mxu0 %v811
      %836 = vmatprep.subr.bf16.mxu0 0
      %837 = vmatpush1.bf16.msra.mxu0 %v812
      %838 = vmatprep.subr.bf16.mxu0 0
      %839 = vmatpush1.bf16.msra.mxu0 %v813
      %840 = vmatprep.subr.bf16.mxu0 0
      %841 = vmatpush1.bf16.msra.mxu0 %v814
      %842 = vmatprep.subr.bf16.mxu0 0
      %843 = vmatpush1.bf16.msra.mxu0 %v815
      %844 = vmatprep.subr.bf16.mxu0 0
      %845 = vmatpush1.bf16.msra.mxu0 %v816
      %846 = vmatprep.subr.bf16.mxu0 0
      %847 = vmatpush1.bf16.msra.mxu0 %v817
      %848 = vmatprep.subr.bf16.mxu0 0
      %849 = vmatpush1.bf16.msra.mxu0 %v818
      %850 = vmatprep.subr.bf16.mxu0 0
      %851 = vmatpush1.bf16.msra.mxu0 %v819
      %852 = vmatprep.subr.bf16.mxu0 0
      %853 = vmatpush1.bf16.msra.mxu0 %v820
      %854 = vmatprep.subr.bf16.mxu0 0
      %855 = vmatpush1.bf16.msra.mxu0 0
      %856 = vmatprep.subr.bf16.mxu0 0
      %857 = vmatpush1.bf16.msra.mxu0 0
      %858 = vmatprep.subr.bf16.mxu0 0
      %859 = vmatpush1.bf16.msra.mxu0 0
      %860 = vmatprep.subr.bf16.mxu0 0
      %861 = vmatpush1.bf16.msra.mxu0 0
      %862 = vmatprep.subr.bf16.mxu0 0
      %863 = vmatpush1.bf16.msra.mxu0 0
      %864 = vmatprep.subr.bf16.mxu0 0
      %865 = vmatpush1.bf16.msra.mxu0 0
      %866 = vmatprep.mubr.bf16.mxu0 %v832
      %867 = vmatmul.mubr.bf16.gmra.mrb[0].mxu0 %v769
      %v868 = vpop.f32.mrb[0].mxu0
      %v869 = vadd.f32 0.0, %v868
      %v870 = vpop.f32.mrb[0].mxu0
      %v871 = vpop.f32.mrb[0].mxu0
      %v872 = vadd.f32 0.0, %v871
      %v873 = vpop.f32.mrb[0].mxu0
      %874 = vdwg.mxu0
      %v876 = vlaneseq
      %v877 = vshrl.u32 %v876, 7
      %v878 = vsub.s32 0, %v877
      %v879 = vrot.slane %v707, %v878
      %v881 = vmul.f32 %v869, %v879
      %v882 = vmul.f32 %v872, %v879
      %v884 = vlaneseq
      %v885 = vshrl.u32 %v884, 7
      %v886 = vsub.s32 0, %v885
      %v887 = vrot.slane %v708, %v886
      %v889 = vadd.f32 %v881, %v887
      %v890 = vadd.f32 %v882, %v887
      %v891 = vtanh.pop %v889
      %v892 = vtanh.pop %v890
      %v893 = vld [vmem:[%s7] sm:$0xf]
      %v894 = vld [vmem:[%s7 + $0x4] sm:$0xf]
      %v895 = vld [vmem:[%s7 + $0x8] sm:$0xf]
      %v896 = vld [vmem:[%s7 + $0xc] sm:$0xf]
      %v897 = vld [vmem:[%s7 + $0x10] sm:$0xf]
      %v898 = vld [vmem:[%s7 + $0x14] sm:$0xf]
      %v899 = vld [vmem:[%s7 + $0x18] sm:$0xf]
      %v900 = vld [vmem:[%s7 + $0x1c] sm:$0xf]
      %v901 = vld [vmem:[%s7 + $0x20] sm:$0xf]
      %v902 = vld [vmem:[%s7 + $0x24] sm:$0xf]
      %v903 = vld [vmem:[%s7 + $0x28] sm:$0xf]
      %v904 = vld [vmem:[%s7 + $0x2c] sm:$0xf]
      %v905 = vld [vmem:[%s7 + $0x30] sm:$0xf]
      %v906 = vld [vmem:[%s7 + $0x34] sm:$0xf]
      %v907 = vld [vmem:[%s7 + $0x38] sm:$0xf]
      %v908 = vld [vmem:[%s7 + $0x3c] sm:$0xf]
      %v909 = vld [vmem:[%s7 + $0x40] sm:$0xf]
      %v910 = vld [vmem:[%s7 + $0x44] sm:$0xf]
      %v911 = vld [vmem:[%s7 + $0x48] sm:$0xf]
      %v912 = vld [vmem:[%s7 + $0x4c] sm:$0xf]
      %v913 = vld [vmem:[%s8] sm:$0x1]
      %v914 = vld [vmem:[%s9] sm:$0x1]
      %v917 = vrot.slane %v891, 6
      %v918 = vrot.slane %v892, 6
      %v919 = vsel %vm534, %v917, %v918
      %v923 = vsel %vm534, 0.0, %v917
      %v924 = vsel %vm534, %v918, 0.0
      %v927 = vrot.slane %v923, 1
      %v928 = vrot.slane %v919, 1
      %v929 = vsel %vm545, %v927, %v928
      %v930 = vrot.slane %v924, 1
      %v931 = vsel %vm545, %v928, %v930
      %932 = vrot.lane.b32.xlu0 %v929, 32
      %v933 = vpop.permute.xlu0 %932
      %934 = vrot.lane.b32.xlu0 %v931, 32
      %v935 = vpop.permute.xlu0 %934
      %v938 = vrot.slane %v923, 2
      %v939 = vrot.slane %v919, 2
      %v940 = vsel %vm557, %v938, %v939
      %v941 = vrot.slane %v924, 2
      %v942 = vsel %vm557, %v939, %v941
      %943 = vrot.lane.b32.xlu0 %v940, 64
      %v944 = vpop.permute.xlu0 %943
      %945 = vrot.lane.b32.xlu0 %v942, 64
      %v946 = vpop.permute.xlu0 %945
      %v949 = vrot.slane %v923, 3
      %v950 = vrot.slane %v919, 3
      %v951 = vsel %vm569, %v949, %v950
      %v952 = vrot.slane %v924, 3
      %v953 = vsel %vm569, %v950, %v952
      %954 = vrot.lane.b32.xlu0 %v951, 96
      %v955 = vpop.permute.xlu0 %954
      %956 = vrot.lane.b32.xlu0 %v953, 96
      %v957 = vpop.permute.xlu0 %956
      %v960 = vrot.slane %v923, 4
      %v961 = vrot.slane %v919, 4
      %v962 = vsel %vm581, %v960, %v961
      %v963 = vrot.slane %v924, 4
      %v964 = vsel %vm581, %v961, %v963
      %v967 = vsel %vm602, %v923, %v933
      %v968 = vsel %vm602, %v919, %v935
      %v969 = vsel %vm763, %v967, %v944
      %v970 = vsel %vm763, %v968, %v946
      %v971 = vsel %vm766, %v969, %v955
      %v972 = vsel %vm766, %v970, %v957
      %v973 = vpack.c.bf16 %v972, %v971
      %v974 = vpack.c.bf16 %v964, %v962
      %v995 = vunpack.c.l.b16 %v893
      %v996 = vunpack.c.l.b16 %v894
      %v997 = vunpack.c.l.b16 %v895
      %v998 = vunpack.c.l.b16 %v896
      %v999 = vunpack.c.l.b16 %v897
      %v1000 = vunpack.c.l.b16 %v898
      %v1001 = vunpack.c.l.b16 %v899
      %v1002 = vunpack.c.l.b16 %v900
      %v1003 = vunpack.c.l.b16 %v901
      %v1004 = vunpack.c.l.b16 %v902
      %v1005 = vunpack.c.l.b16 %v903
      %v1006 = vunpack.c.l.b16 %v904
      %v1007 = vunpack.c.l.b16 %v905
      %v1008 = vunpack.c.l.b16 %v906
      %v1009 = vunpack.c.l.b16 %v907
      %v1010 = vunpack.c.l.b16 %v908
      %v1011 = vunpack.c.l.b16 %v909
      %v1012 = vunpack.c.l.b16 %v910
      %v1013 = vunpack.c.l.b16 %v911
      %v1014 = vunpack.c.l.b16 %v912
      %v1015 = vpack.c.b16 %v996, %v995
      %v1016 = vpack.c.b16 %v998, %v997
      %v1017 = vpack.c.b16 %v1000, %v999
      %v1018 = vpack.c.b16 %v1002, %v1001
      %v1019 = vpack.c.b16 %v1004, %v1003
      %v1020 = vpack.c.b16 %v1006, %v1005
      %v1021 = vpack.c.b16 %v1008, %v1007
      %v1022 = vpack.c.b16 %v1010, %v1009
      %v1023 = vpack.c.b16 %v1012, %v1011
      %v1024 = vpack.c.b16 %v1014, %v1013
      %v1036 = vsel %vm602, %v974, 0
      %1038 = vmatprep.subr.bf16.mxu0 0
      %1039 = vmatpush1.bf16.msra.mxu0 %v1015
      %1040 = vmatprep.subr.bf16.mxu0 0
      %1041 = vmatpush1.bf16.msra.mxu0 %v1016
      %1042 = vmatprep.subr.bf16.mxu0 0
      %1043 = vmatpush1.bf16.msra.mxu0 %v1017
      %1044 = vmatprep.subr.bf16.mxu0 0
      %1045 = vmatpush1.bf16.msra.mxu0 %v1018
      %1046 = vmatprep.subr.bf16.mxu0 0
      %1047 = vmatpush1.bf16.msra.mxu0 %v1019
      %1048 = vmatprep.subr.bf16.mxu0 0
      %1049 = vmatpush1.bf16.msra.mxu0 %v1020
      %1050 = vmatprep.subr.bf16.mxu0 0
      %1051 = vmatpush1.bf16.msra.mxu0 %v1021
      %1052 = vmatprep.subr.bf16.mxu0 0
      %1053 = vmatpush1.bf16.msra.mxu0 %v1022
      %1054 = vmatprep.subr.bf16.mxu0 0
      %1055 = vmatpush1.bf16.msra.mxu0 %v1023
      %1056 = vmatprep.subr.bf16.mxu0 0
      %1057 = vmatpush1.bf16.msra.mxu0 %v1024
      %1058 = vmatprep.subr.bf16.mxu0 0
      %1059 = vmatpush1.bf16.msra.mxu0 0
      %1060 = vmatprep.subr.bf16.mxu0 0
      %1061 = vmatpush1.bf16.msra.mxu0 0
      %1062 = vmatprep.subr.bf16.mxu0 0
      %1063 = vmatpush1.bf16.msra.mxu0 0
      %1064 = vmatprep.subr.bf16.mxu0 0
      %1065 = vmatpush1.bf16.msra.mxu0 0
      %1066 = vmatprep.subr.bf16.mxu0 0
      %1067 = vmatpush1.bf16.msra.mxu0 0
      %1068 = vmatprep.subr.bf16.mxu0 0
      %1069 = vmatpush1.bf16.msra.mxu0 0
      %1070 = vmatprep.mubr.bf16.mxu0 %v1036
      %1071 = vmatmul.mubr.bf16.gmra.mrb[0].mxu0 %v973
      %v1072 = vpop.f32.mrb[0].mxu0
      %v1073 = vadd.f32 0.0, %v1072
      %v1074 = vpop.f32.mrb[0].mxu0
      %v1075 = vpop.f32.mrb[0].mxu0
      %v1076 = vadd.f32 0.0, %v1075
      %v1077 = vpop.f32.mrb[0].mxu0
      %1078 = vdwg.mxu0
      %v1080 = vlaneseq
      %v1081 = vshrl.u32 %v1080, 7
      %v1082 = vsub.s32 0, %v1081
      %v1083 = vrot.slane %v913, %v1082
      %v1085 = vmul.f32 %v1073, %v1083
      %v1086 = vmul.f32 %v1076, %v1083
      %v1088 = vlaneseq
      %v1089 = vshrl.u32 %v1088, 7
      %v1090 = vsub.s32 0, %v1089
      %v1091 = vrot.slane %v914, %v1090
      %v1093 = vadd.f32 %v1085, %v1091
      %v1094 = vadd.f32 %v1086, %v1091
      %v1095 = vtanh.pop %v1093
      %v1096 = vtanh.pop %v1094
      %v1097 = vld [vmem:[%s10] sm:$0xf]
      %v1098 = vld [vmem:[%s10 + $0x4] sm:$0xf]
      %v1099 = vld [vmem:[%s10 + $0x8] sm:$0xf]
      %v1100 = vld [vmem:[%s10 + $0xc] sm:$0xf]
      %v1101 = vld [vmem:[%s10 + $0x10] sm:$0xf]
      %v1102 = vld [vmem:[%s10 + $0x14] sm:$0xf]
      %v1103 = vld [vmem:[%s10 + $0x18] sm:$0xf]
      %v1104 = vld [vmem:[%s10 + $0x1c] sm:$0xf]
      %v1105 = vld [vmem:[%s10 + $0x20] sm:$0xf]
      %v1106 = vld [vmem:[%s10 + $0x24] sm:$0xf]
      %v1107 = vld [vmem:[%s10 + $0x28] sm:$0xf]
      %v1108 = vld [vmem:[%s10 + $0x2c] sm:$0xf]
      %v1109 = vld [vmem:[%s10 + $0x30] sm:$0xf]
      %v1110 = vld [vmem:[%s10 + $0x34] sm:$0xf]
      %v1111 = vld [vmem:[%s10 + $0x38] sm:$0xf]
      %v1112 = vld [vmem:[%s10 + $0x3c] sm:$0xf]
      %v1113 = vld [vmem:[%s10 + $0x40] sm:$0xf]
      %v1114 = vld [vmem:[%s10 + $0x44] sm:$0xf]
      %v1115 = vld [vmem:[%s10 + $0x48] sm:$0xf]
      %v1116 = vld [vmem:[%s10 + $0x4c] sm:$0xf]
      %v1117 = vld [vmem:[%s11] sm:$0x1]
      %v1118 = vld [vmem:[%s12] sm:$0x1]
      %v1121 = vrot.slane %v1095, 6
      %v1122 = vrot.slane %v1096, 6
      %v1123 = vsel %vm534, %v1121, %v1122
      %v1127 = vsel %vm534, 0.0, %v1121
      %v1128 = vsel %vm534, %v1122, 0.0
      %v1131 = vrot.slane %v1127, 1
      %v1132 = vrot.slane %v1123, 1
      %v1133 = vsel %vm545, %v1131, %v1132
      %v1134 = vrot.slane %v1128, 1
      %v1135 = vsel %vm545, %v1132, %v1134
      %1136 = vrot.lane.b32.xlu0 %v1133, 32
      %v1137 = vpop.permute.xlu0 %1136
      %1138 = vrot.lane.b32.xlu0 %v1135, 32
      %v1139 = vpop.permute.xlu0 %1138
      %v1142 = vrot.slane %v1127, 2
      %v1143 = vrot.slane %v1123, 2
      %v1144 = vsel %vm557, %v1142, %v1143
      %v1145 = vrot.slane %v1128, 2
      %v1146 = vsel %vm557, %v1143, %v1145
      %1147 = vrot.lane.b32.xlu0 %v1144, 64
      %v1148 = vpop.permute.xlu0 %1147
      %1149 = vrot.lane.b32.xlu0 %v1146, 64
      %v1150 = vpop.permute.xlu0 %1149
      %v1153 = vrot.slane %v1127, 3
      %v1154 = vrot.slane %v1123, 3
      %v1155 = vsel %vm569, %v1153, %v1154
      %v1156 = vrot.slane %v1128, 3
      %v1157 = vsel %vm569, %v1154, %v1156
      %1158 = vrot.lane.b32.xlu0 %v1155, 96
      %v1159 = vpop.permute.xlu0 %1158
      %1160 = vrot.lane.b32.xlu0 %v1157, 96
      %v1161 = vpop.permute.xlu0 %1160
      %v1164 = vrot.slane %v1127, 4
      %v1165 = vrot.slane %v1123, 4
      %v1166 = vsel %vm581, %v1164, %v1165
      %v1167 = vrot.slane %v1128, 4
      %v1168 = vsel %vm581, %v1165, %v1167
      %v1171 = vsel %vm602, %v1127, %v1137
      %v1172 = vsel %vm602, %v1123, %v1139
      %v1173 = vsel %vm763, %v1171, %v1148
      %v1174 = vsel %vm763, %v1172, %v1150
      %v1175 = vsel %vm766, %v1173, %v1159
      %v1176 = vsel %vm766, %v1174, %v1161
      %v1177 = vpack.c.bf16 %v1176, %v1175
      %v1178 = vpack.c.bf16 %v1168, %v1166
      %v1199 = vunpack.c.l.b16 %v1097
      %v1200 = vunpack.c.l.b16 %v1098
      %v1201 = vunpack.c.l.b16 %v1099
      %v1202 = vunpack.c.l.b16 %v1100
      %v1203 = vunpack.c.l.b16 %v1101
      %v1204 = vunpack.c.l.b16 %v1102
      %v1205 = vunpack.c.l.b16 %v1103
      %v1206 = vunpack.c.l.b16 %v1104
      %v1207 = vunpack.c.l.b16 %v1105
      %v1208 = vunpack.c.l.b16 %v1106
      %v1209 = vunpack.c.l.b16 %v1107
      %v1210 = vunpack.c.l.b16 %v1108
      %v1211 = vunpack.c.l.b16 %v1109
      %v1212 = vunpack.c.l.b16 %v1110
      %v1213 = vunpack.c.l.b16 %v1111
      %v1214 = vunpack.c.l.b16 %v1112
      %v1215 = vunpack.c.l.b16 %v1113
      %v1216 = vunpack.c.l.b16 %v1114
      %v1217 = vunpack.c.l.b16 %v1115
      %v1218 = vunpack.c.l.b16 %v1116
      %v1219 = vpack.c.b16 %v1200, %v1199
      %v1220 = vpack.c.b16 %v1202, %v1201
      %v1221 = vpack.c.b16 %v1204, %v1203
      %v1222 = vpack.c.b16 %v1206, %v1205
      %v1223 = vpack.c.b16 %v1208, %v1207
      %v1224 = vpack.c.b16 %v1210, %v1209
      %v1225 = vpack.c.b16 %v1212, %v1211
      %v1226 = vpack.c.b16 %v1214, %v1213
      %v1227 = vpack.c.b16 %v1216, %v1215
      %v1228 = vpack.c.b16 %v1218, %v1217
      %v1240 = vsel %vm602, %v1178, 0
      %1242 = vmatprep.subr.bf16.mxu0 0
      %1243 = vmatpush1.bf16.msra.mxu0 %v1219
      %1244 = vmatprep.subr.bf16.mxu0 0
      %1245 = vmatpush1.bf16.msra.mxu0 %v1220
      %1246 = vmatprep.subr.bf16.mxu0 0
      %1247 = vmatpush1.bf16.msra.mxu0 %v1221
      %1248 = vmatprep.subr.bf16.mxu0 0
      %1249 = vmatpush1.bf16.msra.mxu0 %v1222
      %1250 = vmatprep.subr.bf16.mxu0 0
      %1251 = vmatpush1.bf16.msra.mxu0 %v1223
      %1252 = vmatprep.subr.bf16.mxu0 0
      %1253 = vmatpush1.bf16.msra.mxu0 %v1224
      %1254 = vmatprep.subr.bf16.mxu0 0
      %1255 = vmatpush1.bf16.msra.mxu0 %v1225
      %1256 = vmatprep.subr.bf16.mxu0 0
      %1257 = vmatpush1.bf16.msra.mxu0 %v1226
      %1258 = vmatprep.subr.bf16.mxu0 0
      %1259 = vmatpush1.bf16.msra.mxu0 %v1227
      %1260 = vmatprep.subr.bf16.mxu0 0
      %1261 = vmatpush1.bf16.msra.mxu0 %v1228
      %1262 = vmatprep.subr.bf16.mxu0 0
      %1263 = vmatpush1.bf16.msra.mxu0 0
      %1264 = vmatprep.subr.bf16.mxu0 0
      %1265 = vmatpush1.bf16.msra.mxu0 0
      %1266 = vmatprep.subr.bf16.mxu0 0
      %1267 = vmatpush1.bf16.msra.mxu0 0
      %1268 = vmatprep.subr.bf16.mxu0 0
      %1269 = vmatpush1.bf16.msra.mxu0 0
      %1270 = vmatprep.subr.bf16.mxu0 0
      %1271 = vmatpush1.bf16.msra.mxu0 0
      %1272 = vmatprep.subr.bf16.mxu0 0
      %1273 = vmatpush1.bf16.msra.mxu0 0
      %1274 = vmatprep.mubr.bf16.mxu0 %v1240
      %1275 = vmatmul.mubr.bf16.gmra.mrb[0].mxu0 %v1177
      %v1276 = vpop.f32.mrb[0].mxu0
      %v1277 = vadd.f32 0.0, %v1276
      %v1278 = vpop.f32.mrb[0].mxu0
      %v1279 = vpop.f32.mrb[0].mxu0
      %v1280 = vadd.f32 0.0, %v1279
      %v1281 = vpop.f32.mrb[0].mxu0
      %1282 = vdwg.mxu0
      %v1284 = vlaneseq
      %v1285 = vshrl.u32 %v1284, 7
      %v1286 = vsub.s32 0, %v1285
      %v1287 = vrot.slane %v1117, %v1286
      %v1289 = vmul.f32 %v1277, %v1287
      %v1290 = vmul.f32 %v1280, %v1287
      %v1292 = vlaneseq
      %v1293 = vshrl.u32 %v1292, 7
      %v1294 = vsub.s32 0, %v1293
      %v1295 = vrot.slane %v1118, %v1294
      %v1297 = vadd.f32 %v1289, %v1295
      %v1298 = vadd.f32 %v1290, %v1295
      %v1299 = vtanh.pop %v1297
      %v1300 = vtanh.pop %v1298
      %v1301 = vld [vmem:[%s13] sm:$0xf]
      %v1302 = vld [vmem:[%s13 + $0x4] sm:$0xf]
      %v1303 = vld [vmem:[%s13 + $0x8] sm:$0xf]
      %v1304 = vld [vmem:[%s13 + $0xc] sm:$0xf]
      %v1305 = vld [vmem:[%s13 + $0x10] sm:$0xf]
      %v1306 = vld [vmem:[%s13 + $0x14] sm:$0xf]
      %v1307 = vld [vmem:[%s13 + $0x18] sm:$0xf]
      %v1308 = vld [vmem:[%s13 + $0x1c] sm:$0xf]
      %v1309 = vld [vmem:[%s13 + $0x20] sm:$0xf]
      %v1310 = vld [vmem:[%s13 + $0x24] sm:$0xf]
      %v1311 = vld [vmem:[%s13 + $0x28] sm:$0xf]
      %v1312 = vld [vmem:[%s13 + $0x2c] sm:$0xf]
      %v1313 = vld [vmem:[%s13 + $0x30] sm:$0xf]
      %v1314 = vld [vmem:[%s13 + $0x34] sm:$0xf]
      %v1315 = vld [vmem:[%s13 + $0x38] sm:$0xf]
      %v1316 = vld [vmem:[%s13 + $0x3c] sm:$0xf]
      %v1317 = vld [vmem:[%s13 + $0x40] sm:$0xf]
      %v1318 = vld [vmem:[%s13 + $0x44] sm:$0xf]
      %v1319 = vld [vmem:[%s13 + $0x48] sm:$0xf]
      %v1320 = vld [vmem:[%s13 + $0x4c] sm:$0xf]
      %v1321 = vld [vmem:[%s14] sm:$0x1]
      %v1322 = vld [vmem:[%s15] sm:$0x1]
      %v1325 = vrot.slane %v1299, 6
      %v1326 = vrot.slane %v1300, 6
      %v1327 = vsel %vm534, %v1325, %v1326
      %v1331 = vsel %vm534, 0.0, %v1325
      %v1332 = vsel %vm534, %v1326, 0.0
      %v1335 = vrot.slane %v1331, 1
      %v1336 = vrot.slane %v1327, 1
      %v1337 = vsel %vm545, %v1335, %v1336
      %v1338 = vrot.slane %v1332, 1
      %v1339 = vsel %vm545, %v1336, %v1338
      %1340 = vrot.lane.b32.xlu0 %v1337, 32
      %v1341 = vpop.permute.xlu0 %1340
      %1342 = vrot.lane.b32.xlu0 %v1339, 32
      %v1343 = vpop.permute.xlu0 %1342
      %v1346 = vrot.slane %v1331, 2
      %v1347 = vrot.slane %v1327, 2
      %v1348 = vsel %vm557, %v1346, %v1347
      %v1349 = vrot.slane %v1332, 2
      %v1350 = vsel %vm557, %v1347, %v1349
      %1351 = vrot.lane.b32.xlu0 %v1348, 64
      %v1352 = vpop.permute.xlu0 %1351
      %1353 = vrot.lane.b32.xlu0 %v1350, 64
      %v1354 = vpop.permute.xlu0 %1353
      %v1357 = vrot.slane %v1331, 3
      %v1358 = vrot.slane %v1327, 3
      %v1359 = vsel %vm569, %v1357, %v1358
      %v1360 = vrot.slane %v1332, 3
      %v1361 = vsel %vm569, %v1358, %v1360
      %1362 = vrot.lane.b32.xlu0 %v1359, 96
      %v1363 = vpop.permute.xlu0 %1362
      %1364 = vrot.lane.b32.xlu0 %v1361, 96
      %v1365 = vpop.permute.xlu0 %1364
      %v1368 = vrot.slane %v1331, 4
      %v1369 = vrot.slane %v1327, 4
      %v1370 = vsel %vm581, %v1368, %v1369
      %v1371 = vrot.slane %v1332, 4
      %v1372 = vsel %vm581, %v1369, %v1371
      %v1375 = vsel %vm602, %v1331, %v1341
      %v1376 = vsel %vm602, %v1327, %v1343
      %v1377 = vsel %vm763, %v1375, %v1352
      %v1378 = vsel %vm763, %v1376, %v1354
      %v1379 = vsel %vm766, %v1377, %v1363
      %v1380 = vsel %vm766, %v1378, %v1365
      %v1381 = vpack.c.bf16 %v1380, %v1379
      %v1382 = vpack.c.bf16 %v1372, %v1370
      %v1403 = vunpack.c.l.b16 %v1301
      %v1404 = vunpack.c.l.b16 %v1302
      %v1405 = vunpack.c.l.b16 %v1303
      %v1406 = vunpack.c.l.b16 %v1304
      %v1407 = vunpack.c.l.b16 %v1305
      %v1408 = vunpack.c.l.b16 %v1306
      %v1409 = vunpack.c.l.b16 %v1307
      %v1410 = vunpack.c.l.b16 %v1308
      %v1411 = vunpack.c.l.b16 %v1309
      %v1412 = vunpack.c.l.b16 %v1310
      %v1413 = vunpack.c.l.b16 %v1311
      %v1414 = vunpack.c.l.b16 %v1312
      %v1415 = vunpack.c.l.b16 %v1313
      %v1416 = vunpack.c.l.b16 %v1314
      %v1417 = vunpack.c.l.b16 %v1315
      %v1418 = vunpack.c.l.b16 %v1316
      %v1419 = vunpack.c.l.b16 %v1317
      %v1420 = vunpack.c.l.b16 %v1318
      %v1421 = vunpack.c.l.b16 %v1319
      %v1422 = vunpack.c.l.b16 %v1320
      %v1423 = vpack.c.b16 %v1404, %v1403
      %v1424 = vpack.c.b16 %v1406, %v1405
      %v1425 = vpack.c.b16 %v1408, %v1407
      %v1426 = vpack.c.b16 %v1410, %v1409
      %v1427 = vpack.c.b16 %v1412, %v1411
      %v1428 = vpack.c.b16 %v1414, %v1413
      %v1429 = vpack.c.b16 %v1416, %v1415
      %v1430 = vpack.c.b16 %v1418, %v1417
      %v1431 = vpack.c.b16 %v1420, %v1419
      %v1432 = vpack.c.b16 %v1422, %v1421
      %v1444 = vsel %vm602, %v1382, 0
      %1446 = vmatprep.subr.bf16.mxu0 0
      %1447 = vmatpush1.bf16.msra.mxu0 %v1423
      %1448 = vmatprep.subr.bf16.mxu0 0
      %1449 = vmatpush1.bf16.msra.mxu0 %v1424
      %1450 = vmatprep.subr.bf16.mxu0 0
      %1451 = vmatpush1.bf16.msra.mxu0 %v1425
      %1452 = vmatprep.subr.bf16.mxu0 0
      %1453 = vmatpush1.bf16.msra.mxu0 %v1426
      %1454 = vmatprep.subr.bf16.mxu0 0
      %1455 = vmatpush1.bf16.msra.mxu0 %v1427
      %1456 = vmatprep.subr.bf16.mxu0 0
      %1457 = vmatpush1.bf16.msra.mxu0 %v1428
      %1458 = vmatprep.subr.bf16.mxu0 0
      %1459 = vmatpush1.bf16.msra.mxu0 %v1429
      %1460 = vmatprep.subr.bf16.mxu0 0
      %1461 = vmatpush1.bf16.msra.mxu0 %v1430
      %1462 = vmatprep.subr.bf16.mxu0 0
      %1463 = vmatpush1.bf16.msra.mxu0 %v1431
      %1464 = vmatprep.subr.bf16.mxu0 0
      %1465 = vmatpush1.bf16.msra.mxu0 %v1432
      %1466 = vmatprep.subr.bf16.mxu0 0
      %1467 = vmatpush1.bf16.msra.mxu0 0
      %1468 = vmatprep.subr.bf16.mxu0 0
      %1469 = vmatpush1.bf16.msra.mxu0 0
      %1470 = vmatprep.subr.bf16.mxu0 0
      %1471 = vmatpush1.bf16.msra.mxu0 0
      %1472 = vmatprep.subr.bf16.mxu0 0
      %1473 = vmatpush1.bf16.msra.mxu0 0
      %1474 = vmatprep.subr.bf16.mxu0 0
      %1475 = vmatpush1.bf16.msra.mxu0 0
      %1476 = vmatprep.subr.bf16.mxu0 0
      %1477 = vmatpush1.bf16.msra.mxu0 0
      %1478 = vmatprep.mubr.bf16.mxu0 %v1444
      %1479 = vmatmul.mubr.bf16.gmra.mrb[0].mxu0 %v1381
      %v1480 = vpop.f32.mrb[0].mxu0
      %v1481 = vadd.f32 0.0, %v1480
      %v1482 = vpop.f32.mrb[0].mxu0
      %v1483 = vpop.f32.mrb[0].mxu0
      %v1484 = vadd.f32 0.0, %v1483
      %v1485 = vpop.f32.mrb[0].mxu0
      %1486 = vdwg.mxu0
      %v1488 = vlaneseq
      %v1489 = vshrl.u32 %v1488, 7
      %v1490 = vsub.s32 0, %v1489
      %v1491 = vrot.slane %v1321, %v1490
      %v1493 = vmul.f32 %v1481, %v1491
      %v1494 = vmul.f32 %v1484, %v1491
      %v1496 = vlaneseq
      %v1497 = vshrl.u32 %v1496, 7
      %v1498 = vsub.s32 0, %v1497
      %v1499 = vrot.slane %v1322, %v1498
      %v1501 = vadd.f32 %v1493, %v1499
      %v1502 = vadd.f32 %v1494, %v1499
      %1503 = vst.msk [vmem:[%s521] sm:$0xff] %vm593, %v1501
      %1504 = vst.msk [vmem:[%s521 + $0x8] sm:$0xff] %vm593, %v1502
      %p1505 = scmp.lt.s32.totalorder %s27, 1
      %s1506 = scalar_select %p1505, %s27, 1
      %s1507 = smul.addr %s1506, 2
      %s1508 = smul.addr %s1507, 8
      %s1509 = scalar_lea.vmem %s16, %s1508
      // Predicated region
      $region85: #{tpu_custom_call.1} parent=83 // pred_check
        %p1510 = pneg %p386
      $region86: #{tpu_custom_call.1} parent=83 // pred_check_branch
        %1512 = sbr.rel (%p1510) target = $region88
      $region87: #{tpu_custom_call.1} parent=83 // pred_region
        _
      $region88: #{tpu_custom_call.1} parent=83 // pred_fallthru
        _
    $region84: #{tpu_custom_call.1} parent=5 // pred_fallthru
      _
    %p1513 = scmp.le.s32.totalorder 2, %s22
    // Predicated region
    $region89: #{tpu_custom_call.1} parent=5 // pred_check
      %p1514 = pneg %p1513
    $region90: #{tpu_custom_call.1} parent=5 // pred_check_branch
      %1516 = sbr.rel (%p1514) target = $region92
    $region91: #{tpu_custom_call.1} parent=5 // pred_region
      %s1517 = ssub.s32 %s22, 2
      // Predicated region
      $region93: #{tpu_custom_call.1} parent=91 // pred_check
        %p1518 = pneg %p392
      $region94: #{tpu_custom_call.1} parent=91 // pred_check_branch
        %1520 = sbr.rel (%p1518) target = $region96
      $region95: #{tpu_custom_call.1} parent=91 // pred_region
        %p1521 = scmp.lt.s32.totalorder %s28, 1
        %s1522 = scalar_select %p1521, %s28, 1
        %s1523 = smul.addr %s1522, 2
        %s1524 = smul.addr %s1523, 8
        %s1525 = scalar_lea.vmem %s16, %s1524
      $region96: #{tpu_custom_call.1} parent=91 // pred_fallthru
        _
    $region92: #{tpu_custom_call.1} parent=5 // pred_fallthru
      _
  $region6: #{tpu_custom_call.1} parent=0 // loop_footer
    %s26 = sadd.s32 1, %s22
  $region7: #{tpu_custom_call.1} parent=0 // loop_footer_branch
    %21 = sbr.rel target = $region3
  $region8: #{tpu_custom_call.1} parent=0 // loop_exit
    _

</llo_original>
